<compile_context>
chip_gen: v7x
topology: tpu7x:2x2x1
jax: 0.10.0
libtpu: 0.0.40
codegen_flags: <defaults>
</compile_context>

<pallas_src>
import functools

import jax
import jax.numpy as jnp
from jax import lax
from jax.experimental import pallas as pl
from jax.experimental.pallas import tpu as pltpu


# ----------------------------------------------------------------------------
# Fused forward kernel
# ----------------------------------------------------------------------------
def _net_fwd_kernel(betas_ref, x_ref, lin1_w_ref, lin1_b_ref,
                    convs_w_ref, adj_ref, lin2_w_ref, lin2_b_ref,
                    o_ref, *, num_layers):
    # ---- lin1 + relu (bf16 MXU operands, f32 accumulate) ----
    h = jnp.dot(x_ref[...], lin1_w_ref[...],
                preferred_element_type=jnp.float32)
    # Keep the resident node activation in bf16 between layers.
    h = jnp.maximum(h + lin1_b_ref[...], 0.0).astype(jnp.bfloat16)

    feat = lin1_w_ref.shape[1]
    ones_row = jnp.ones((1, feat), jnp.float32)   # splat constant (1 vreg)

    # ---- AGNNConv layers (statically unrolled; conv weights stacked (L,F,F)) ----
    for l in range(num_layers):
        beta = betas_ref[l]                       # scalar from SMEM
        w = convs_w_ref[l]                        # (F, F) bf16, static index

        # Feature transform.
        hw = jnp.dot(h, w, preferred_element_type=jnp.float32)   # (N,F) f32
        hw_b = hw.astype(jnp.bfloat16)

        # Raw SDDMM <hw_i, hw_j>: issued immediately after hw pops; the L2
        # normalization is hoisted off its critical path and applied as a
        # row/column rescale of the f32 scores below.
        s_raw = lax.dot_general(
            hw_b, hw_b,
            dimension_numbers=(((1,), (1,)), ((), ())),
            preferred_element_type=jnp.float32)                  # (N,N)

        # Inverse L2 norms, computed concurrently with the SDDMM:
        #   (N,1) via XLU row-reduce, (1,N) via a tiny f32 MXU matvec against
        #   a ones row (no (N,1)->(1,N) transpose needed).
        hw2 = hw * hw
        inv_col = lax.rsqrt(
            jnp.sum(hw2, axis=-1, keepdims=True) + 1e-12)        # (N,1)
        sq_row = lax.dot_general(
            ones_row, hw2,
            dimension_numbers=(((1,), (1,)), ((), ())),
            preferred_element_type=jnp.float32)                  # (1,N)
        inv_row = lax.rsqrt(sq_row + 1e-12)

        # scores[i,j] = beta * cos(hw_i, hw_j)
        scores = s_raw * (beta * inv_col) * inv_row

        # Masked row softmax over neighbors.  Cosine scores are bounded by
        # |beta|, so a scalar shift replaces the per-row max (drops an (N,N)
        # XLU reduce from the serial chain); the int8 adjacency is re-read per
        # layer so no f32 mask is pinned across the unrolled loop.
        # NOTE: rows need at least one neighbor (self-loops guarantee it);
        #       an isolated row would hit a 0 denominator.
        shift = jnp.minimum(jnp.abs(beta), 30.0)
        adj_nz = adj_ref[...] != 0
        e = jnp.where(adj_nz, jnp.exp(scores - shift), 0.0)
        denom = jnp.sum(e, axis=-1, keepdims=True)               # (N,1)

        # SpMM with deferred normalization; exact reciprocal so attention rows
        # sum to 1 to f32 accuracy.
        agg = jnp.dot(e.astype(jnp.bfloat16), hw_b,
                      preferred_element_type=jnp.float32)
        agg = agg * pl.reciprocal(denom, approx=False)
        h = jnp.maximum(agg, 0.0).astype(jnp.bfloat16)           # F.relu(conv)

    # ---- lin2 + log_softmax (output padded lane-dense to 128 columns) ----
    y = jnp.dot(h, lin2_w_ref[...], preferred_element_type=jnp.float32)
    y = y + lin2_b_ref[...]                       # padded bias = -1e30 -> exp=0
    m2 = jnp.max(y, axis=-1, keepdims=True)
    z = y - m2
    lse = jnp.log(jnp.sum(jnp.exp(z), axis=-1, keepdims=True))
    o_ref[...] = z - lse


# ----------------------------------------------------------------------------
# Wrapper (whole problem fits in VMEM at these sizes -> single invocation)
# ----------------------------------------------------------------------------
_VMEM = pl.BlockSpec(memory_space=pltpu.MemorySpace.VMEM)
_SMEM = pl.BlockSpec(memory_space=pltpu.MemorySpace.SMEM)


def net_forward(params, x, adj_i8):
    n = x.shape[0]
    num_layers = params["convs_w"].shape[0]
    out_size = params["lin2_w"].shape[1]
    out_pad = ((out_size + 127) // 128) * 128
    pad = out_pad - out_size

    # Pre-cast activations/weights to bf16 (halves DMA); pad lin2 to 128
    # lane-dense output columns (zero weights + -1e30 bias so padded columns
    # vanish from the log_softmax sum); sliced back off after the kernel.
    x_bf16 = x.astype(jnp.bfloat16)
    lin1_w = params["lin1_w"].astype(jnp.bfloat16)
    convs_w = params["convs_w"].astype(jnp.bfloat16)
    lin2_w = jnp.pad(params["lin2_w"], ((0, 0), (0, pad))).astype(jnp.bfloat16)
    lin2_b = jnp.pad(params["lin2_b"], ((0, 0), (0, pad)),
                     constant_values=-1e30).astype(jnp.float32)

    out = pl.pallas_call(
        functools.partial(_net_fwd_kernel, num_layers=num_layers),
        out_shape=jax.ShapeDtypeStruct((n, out_pad), jnp.float32),
        in_specs=[_SMEM, _VMEM, _VMEM, _VMEM, _VMEM, _VMEM, _VMEM, _VMEM],
        out_specs=_VMEM,
    )(params["betas"], x_bf16, lin1_w, params["lin1_b"], convs_w, adj_i8,
      lin2_w, lin2_b)
    return out[:, :out_size]


def init_params(key, in_size, hid_size, out_size, num_layers):
    ks = jax.random.split(key, 2 + num_layers)
    convs_w = jnp.stack([
        jax.random.normal(ks[2 + i], (hid_size, hid_size), jnp.float32)
        * (1.0 / jnp.sqrt(hid_size))
        for i in range(num_layers)
    ])                                                   # (L, F, F)
    return {
        "lin1_w": (jax.random.normal(ks[0], (in_size, hid_size), jnp.float32)
                   * (1.0 / jnp.sqrt(in_size))),
        "lin1_b": jnp.zeros((1, hid_size), jnp.float32),
        "lin2_w": (jax.random.normal(ks[1], (hid_size, out_size), jnp.float32)
                   * (1.0 / jnp.sqrt(hid_size))),
        "lin2_b": jnp.zeros((1, out_size), jnp.float32),
        "convs_w": convs_w,
        "betas": jnp.ones((num_layers,), jnp.float32),   # AGNN beta, init 1.0
    }


if __name__ == "__main__":
    # Small synthetic graph consistent with the module's forward.
    N = 128          # number of nodes
    IN_SIZE = 64
    HID_SIZE = 128
    OUT_SIZE = 16
    NUM_LAYERS = 2

    key = jax.random.PRNGKey(0)
    k_x, k_adj, k_p = jax.random.split(key, 3)

    x = jax.random.normal(k_x, (N, IN_SIZE), jnp.float32)

    # Random sparse adjacency (~10% density) + self loops, stored as int8 mask.
    adj = jax.random.uniform(k_adj, (N, N)) < 0.1
    adj = jnp.logical_or(adj, jnp.eye(N, dtype=bool)).astype(jnp.int8)

    params = init_params(k_p, IN_SIZE, HID_SIZE, OUT_SIZE, NUM_LAYERS)

    fwd = jax.jit(net_forward)
    out = fwd(params, x, adj)
    out = jax.block_until_ready(out)

    assert out.shape == (N, OUT_SIZE)
    # log_softmax rows should exponentiate-and-sum to ~1
    assert bool(jnp.all(jnp.abs(jnp.sum(jnp.exp(out), axis=1) - 1.0) < 1e-3))
    print("KERNEL_OK")
</pallas_src>

<mosaic_0001>
module attributes {stable_mosaic.version = 11 : i64} {
  func.func @_net_fwd_kernel(%arg0: memref<2xf32, #tpu.memory_space<smem>>, %arg1: memref<128x64xbf16, #tpu.memory_space<vmem>>, %arg2: memref<64x128xbf16, #tpu.memory_space<vmem>>, %arg3: memref<1x128xf32, #tpu.memory_space<vmem>>, %arg4: memref<2x128x128xbf16, #tpu.memory_space<vmem>>, %arg5: memref<128x128xi8, #tpu.memory_space<vmem>>, %arg6: memref<128x128xbf16, #tpu.memory_space<vmem>>, %arg7: memref<1x128xf32, #tpu.memory_space<vmem>>, %arg8: memref<128x128xf32, #tpu.memory_space<vmem>>) attributes {dimension_semantics = [], scalar_prefetch = 0 : i64, scratch_operands = 0 : i64, tpu.core_type = #tpu.core_type<tc>} {
    %c0 = arith.constant 0 : index
    %c0_0 = arith.constant 0 : index
    %0 = vector.load %arg1[%c0, %c0_0] : memref<128x64xbf16, #tpu.memory_space<vmem>>, vector<128x64xbf16>
    %c0_1 = arith.constant 0 : index
    %c0_2 = arith.constant 0 : index
    %1 = vector.load %arg2[%c0_1, %c0_2] : memref<64x128xbf16, #tpu.memory_space<vmem>>, vector<64x128xbf16>
    %cst = arith.constant dense<0.000000e+00> : vector<128x128xf32>
    %2 = tpu.matmul %0, %1, %cst {dimension_numbers = #tpu.dot_dimension_numbers<[1], [0], [0], [1], [0, 0, 1, 1], [], []>} : vector<128x64xbf16>, vector<64x128xbf16>, vector<128x128xf32> -> vector<128x128xf32>
    %c0_3 = arith.constant 0 : index
    %c0_4 = arith.constant 0 : index
    %3 = vector.load %arg3[%c0_3, %c0_4] : memref<1x128xf32, #tpu.memory_space<vmem>>, vector<1x128xf32>
    %4 = vector.broadcast %3 : vector<1x128xf32> to vector<128x128xf32>
    %5 = arith.addf %2, %4 : vector<128x128xf32>
    %cst_5 = arith.constant 0.000000e+00 : f32
    %6 = vector.broadcast %cst_5 : f32 to vector<128x128xf32>
    %7 = arith.maximumf %5, %6 : vector<128x128xf32>
    %8 = arith.truncf %7 : vector<128x128xf32> to vector<128x128xbf16>
    %cst_6 = arith.constant 1.000000e+00 : f32
    %9 = vector.broadcast %cst_6 : f32 to vector<1x128xf32>
    %c0_7 = arith.constant 0 : index
    %10 = memref.load %arg0[%c0_7] : memref<2xf32, #tpu.memory_space<smem>>
    %c0_8 = arith.constant 0 : index
    %c0_9 = arith.constant 0 : index
    %c0_10 = arith.constant 0 : index
    %11 = vector.load %arg4[%c0_8, %c0_9, %c0_10] : memref<2x128x128xbf16, #tpu.memory_space<vmem>>, vector<1x128x128xbf16>
    %12 = vector.shape_cast %11 : vector<1x128x128xbf16> to vector<128x128xbf16>
    %cst_11 = arith.constant dense<0.000000e+00> : vector<128x128xf32>
    %13 = tpu.matmul %8, %12, %cst_11 {dimension_numbers = #tpu.dot_dimension_numbers<[1], [0], [0], [1], [0, 0, 1, 1], [], []>} : vector<128x128xbf16>, vector<128x128xbf16>, vector<128x128xf32> -> vector<128x128xf32>
    %14 = arith.truncf %13 : vector<128x128xf32> to vector<128x128xbf16>
    %cst_12 = arith.constant dense<0.000000e+00> : vector<128x128xf32>
    %15 = tpu.matmul %14, %14, %cst_12 {dimension_numbers = #tpu.dot_dimension_numbers<[1], [1], [0], [0], [0, 0, 1, 0], [], []>} : vector<128x128xbf16>, vector<128x128xbf16>, vector<128x128xf32> -> vector<128x128xf32>
    %16 = arith.mulf %13, %13 : vector<128x128xf32>
    %cst_13 = arith.constant dense<0.000000e+00> : vector<128xf32>
    %17 = vector.multi_reduction <add>, %16, %cst_13 [1] : vector<128x128xf32> to vector<128xf32>
    %18 = vector.shape_cast %17 : vector<128xf32> to vector<128x1xf32>
    %cst_14 = arith.constant 9.99999996E-13 : f32
    %19 = vector.broadcast %cst_14 : f32 to vector<128x1xf32>
    %20 = arith.addf %18, %19 : vector<128x1xf32>
    %21 = math.rsqrt %20 : vector<128x1xf32>
    %cst_15 = arith.constant dense<0.000000e+00> : vector<1x128xf32>
    %22 = tpu.matmul %9, %16, %cst_15 {dimension_numbers = #tpu.dot_dimension_numbers<[1], [1], [0], [0], [0, 0, 1, 0], [], []>} : vector<1x128xf32>, vector<128x128xf32>, vector<1x128xf32> -> vector<1x128xf32>
    %cst_16 = arith.constant 9.99999996E-13 : f32
    %23 = vector.broadcast %cst_16 : f32 to vector<1x128xf32>
    %24 = arith.addf %22, %23 : vector<1x128xf32>
    %25 = math.rsqrt %24 : vector<1x128xf32>
    %26 = vector.broadcast %10 : f32 to vector<128x1xf32>
    %27 = arith.mulf %26, %21 : vector<128x1xf32>
    %28 = vector.broadcast %27 : vector<128x1xf32> to vector<128x128xf32>
    %29 = arith.mulf %15, %28 : vector<128x128xf32>
    %30 = vector.broadcast %25 : vector<1x128xf32> to vector<128x128xf32>
    %31 = arith.mulf %29, %30 : vector<128x128xf32>
    %32 = math.absf %10 : f32
    %cst_17 = arith.constant 3.000000e+01 : f32
    %33 = arith.minimumf %32, %cst_17 : f32
    %c0_18 = arith.constant 0 : index
    %c0_19 = arith.constant 0 : index
    %34 = vector.load %arg5[%c0_18, %c0_19] : memref<128x128xi8, #tpu.memory_space<vmem>>, vector<128x128xi8>
    %c0_i8 = arith.constant 0 : i8
    %35 = vector.broadcast %c0_i8 : i8 to vector<128x128xi8>
    %36 = arith.cmpi ne, %34, %35 : vector<128x128xi8>
    %37 = vector.broadcast %33 : f32 to vector<128x128xf32>
    %38 = arith.subf %31, %37 : vector<128x128xf32>
    %39 = math.exp %38 : vector<128x128xf32>
    %cst_20 = arith.constant 0.000000e+00 : f32
    %40 = vector.broadcast %cst_20 : f32 to vector<128x128xf32>
    %41 = arith.select %36, %39, %40 : vector<128x128xi1>, vector<128x128xf32>
    %cst_21 = arith.constant dense<0.000000e+00> : vector<128xf32>
    %42 = vector.multi_reduction <add>, %41, %cst_21 [1] : vector<128x128xf32> to vector<128xf32>
    %43 = vector.shape_cast %42 : vector<128xf32> to vector<128x1xf32>
    %44 = arith.truncf %41 : vector<128x128xf32> to vector<128x128xbf16>
    %cst_22 = arith.constant dense<0.000000e+00> : vector<128x128xf32>
    %45 = tpu.matmul %44, %14, %cst_22 {dimension_numbers = #tpu.dot_dimension_numbers<[1], [0], [0], [1], [0, 0, 1, 1], [], []>} : vector<128x128xbf16>, vector<128x128xbf16>, vector<128x128xf32> -> vector<128x128xf32>
    %46 = tpu.reciprocal %43 : vector<128x1xf32> -> vector<128x1xf32>
    %47 = vector.broadcast %46 : vector<128x1xf32> to vector<128x128xf32>
    %48 = arith.mulf %45, %47 : vector<128x128xf32>
    %cst_23 = arith.constant 0.000000e+00 : f32
    %49 = vector.broadcast %cst_23 : f32 to vector<128x128xf32>
    %50 = arith.maximumf %48, %49 : vector<128x128xf32>
    %51 = arith.truncf %50 : vector<128x128xf32> to vector<128x128xbf16>
    %c1 = arith.constant 1 : index
    %52 = memref.load %arg0[%c1] : memref<2xf32, #tpu.memory_space<smem>>
    %c1_24 = arith.constant 1 : index
    %c0_25 = arith.constant 0 : index
    %c0_26 = arith.constant 0 : index
    %53 = vector.load %arg4[%c1_24, %c0_25, %c0_26] : memref<2x128x128xbf16, #tpu.memory_space<vmem>>, vector<1x128x128xbf16>
    %54 = vector.shape_cast %53 : vector<1x128x128xbf16> to vector<128x128xbf16>
    %cst_27 = arith.constant dense<0.000000e+00> : vector<128x128xf32>
    %55 = tpu.matmul %51, %54, %cst_27 {dimension_numbers = #tpu.dot_dimension_numbers<[1], [0], [0], [1], [0, 0, 1, 1], [], []>} : vector<128x128xbf16>, vector<128x128xbf16>, vector<128x128xf32> -> vector<128x128xf32>
    %56 = arith.truncf %55 : vector<128x128xf32> to vector<128x128xbf16>
    %cst_28 = arith.constant dense<0.000000e+00> : vector<128x128xf32>
    %57 = tpu.matmul %56, %56, %cst_28 {dimension_numbers = #tpu.dot_dimension_numbers<[1], [1], [0], [0], [0, 0, 1, 0], [], []>} : vector<128x128xbf16>, vector<128x128xbf16>, vector<128x128xf32> -> vector<128x128xf32>
    %58 = arith.mulf %55, %55 : vector<128x128xf32>
    %cst_29 = arith.constant dense<0.000000e+00> : vector<128xf32>
    %59 = vector.multi_reduction <add>, %58, %cst_29 [1] : vector<128x128xf32> to vector<128xf32>
    %60 = vector.shape_cast %59 : vector<128xf32> to vector<128x1xf32>
    %cst_30 = arith.constant 9.99999996E-13 : f32
    %61 = vector.broadcast %cst_30 : f32 to vector<128x1xf32>
    %62 = arith.addf %60, %61 : vector<128x1xf32>
    %63 = math.rsqrt %62 : vector<128x1xf32>
    %cst_31 = arith.constant dense<0.000000e+00> : vector<1x128xf32>
    %64 = tpu.matmul %9, %58, %cst_31 {dimension_numbers = #tpu.dot_dimension_numbers<[1], [1], [0], [0], [0, 0, 1, 0], [], []>} : vector<1x128xf32>, vector<128x128xf32>, vector<1x128xf32> -> vector<1x128xf32>
    %cst_32 = arith.constant 9.99999996E-13 : f32
    %65 = vector.broadcast %cst_32 : f32 to vector<1x128xf32>
    %66 = arith.addf %64, %65 : vector<1x128xf32>
    %67 = math.rsqrt %66 : vector<1x128xf32>
    %68 = vector.broadcast %52 : f32 to vector<128x1xf32>
    %69 = arith.mulf %68, %63 : vector<128x1xf32>
    %70 = vector.broadcast %69 : vector<128x1xf32> to vector<128x128xf32>
    %71 = arith.mulf %57, %70 : vector<128x128xf32>
    %72 = vector.broadcast %67 : vector<1x128xf32> to vector<128x128xf32>
    %73 = arith.mulf %71, %72 : vector<128x128xf32>
    %74 = math.absf %52 : f32
    %cst_33 = arith.constant 3.000000e+01 : f32
    %75 = arith.minimumf %74, %cst_33 : f32
    %c0_34 = arith.constant 0 : index
    %c0_35 = arith.constant 0 : index
    %76 = vector.load %arg5[%c0_34, %c0_35] : memref<128x128xi8, #tpu.memory_space<vmem>>, vector<128x128xi8>
    %c0_i8_36 = arith.constant 0 : i8
    %77 = vector.broadcast %c0_i8_36 : i8 to vector<128x128xi8>
    %78 = arith.cmpi ne, %76, %77 : vector<128x128xi8>
    %79 = vector.broadcast %75 : f32 to vector<128x128xf32>
    %80 = arith.subf %73, %79 : vector<128x128xf32>
    %81 = math.exp %80 : vector<128x128xf32>
    %cst_37 = arith.constant 0.000000e+00 : f32
    %82 = vector.broadcast %cst_37 : f32 to vector<128x128xf32>
    %83 = arith.select %78, %81, %82 : vector<128x128xi1>, vector<128x128xf32>
    %cst_38 = arith.constant dense<0.000000e+00> : vector<128xf32>
    %84 = vector.multi_reduction <add>, %83, %cst_38 [1] : vector<128x128xf32> to vector<128xf32>
    %85 = vector.shape_cast %84 : vector<128xf32> to vector<128x1xf32>
    %86 = arith.truncf %83 : vector<128x128xf32> to vector<128x128xbf16>
    %cst_39 = arith.constant dense<0.000000e+00> : vector<128x128xf32>
    %87 = tpu.matmul %86, %56, %cst_39 {dimension_numbers = #tpu.dot_dimension_numbers<[1], [0], [0], [1], [0, 0, 1, 1], [], []>} : vector<128x128xbf16>, vector<128x128xbf16>, vector<128x128xf32> -> vector<128x128xf32>
    %88 = tpu.reciprocal %85 : vector<128x1xf32> -> vector<128x1xf32>
    %89 = vector.broadcast %88 : vector<128x1xf32> to vector<128x128xf32>
    %90 = arith.mulf %87, %89 : vector<128x128xf32>
    %cst_40 = arith.constant 0.000000e+00 : f32
    %91 = vector.broadcast %cst_40 : f32 to vector<128x128xf32>
    %92 = arith.maximumf %90, %91 : vector<128x128xf32>
    %93 = arith.truncf %92 : vector<128x128xf32> to vector<128x128xbf16>
    %c0_41 = arith.constant 0 : index
    %c0_42 = arith.constant 0 : index
    %94 = vector.load %arg6[%c0_41, %c0_42] : memref<128x128xbf16, #tpu.memory_space<vmem>>, vector<128x128xbf16>
    %cst_43 = arith.constant dense<0.000000e+00> : vector<128x128xf32>
    %95 = tpu.matmul %93, %94, %cst_43 {dimension_numbers = #tpu.dot_dimension_numbers<[1], [0], [0], [1], [0, 0, 1, 1], [], []>} : vector<128x128xbf16>, vector<128x128xbf16>, vector<128x128xf32> -> vector<128x128xf32>
    %c0_44 = arith.constant 0 : index
    %c0_45 = arith.constant 0 : index
    %96 = vector.load %arg7[%c0_44, %c0_45] : memref<1x128xf32, #tpu.memory_space<vmem>>, vector<1x128xf32>
    %97 = vector.broadcast %96 : vector<1x128xf32> to vector<128x128xf32>
    %98 = arith.addf %95, %97 : vector<128x128xf32>
    %cst_46 = arith.constant dense<0xFF800000> : vector<128xf32>
    %99 = vector.multi_reduction <maximumf>, %98, %cst_46 [1] : vector<128x128xf32> to vector<128xf32>
    %100 = vector.shape_cast %99 : vector<128xf32> to vector<128x1xf32>
    %101 = vector.broadcast %100 : vector<128x1xf32> to vector<128x128xf32>
    %102 = arith.subf %98, %101 : vector<128x128xf32>
    %103 = math.exp %102 : vector<128x128xf32>
    %cst_47 = arith.constant dense<0.000000e+00> : vector<128xf32>
    %104 = vector.multi_reduction <add>, %103, %cst_47 [1] : vector<128x128xf32> to vector<128xf32>
    %105 = vector.shape_cast %104 : vector<128xf32> to vector<128x1xf32>
    %106 = math.log %105 : vector<128x1xf32>
    %107 = vector.broadcast %106 : vector<128x1xf32> to vector<128x128xf32>
    %108 = arith.subf %102, %107 : vector<128x128xf32>
    %c0_48 = arith.constant 0 : index
    %c0_49 = arith.constant 0 : index
    %109 = vector.load %arg8[%c0_48, %c0_49] : memref<128x128xf32, #tpu.memory_space<vmem>>, vector<128x128xf32>
    tpu.vector_store %arg8[%c0_48, %c0_49], %108 {strides = array<i32>} : memref<128x128xf32, #tpu.memory_space<vmem>>, vector<128x128xf32>,
    return
  }
}

</mosaic_0001>

<llo_original>
// kernel: net_forward.1
$region0: #{net_forward.1}
  #allocation0 [shape = 'u32[]', space=smem, size = 0x4, offset = 0x4, fixed_abs, tag = 'smem constant byte address 0x4 - core index']
  #allocation1 [shape = 'u32[144,128]{1,0:T(1,128)}', space=vmem, size = 0x12000, scoped, tag = 'internal scratch']
  %s0 = inlined_call_operand.vmem [shape: f32[2], index: 0, kind: input, shape index: {}]
  %s1 = inlined_call_operand.vmem [shape: bf16[128,64], index: 1, kind: input, shape index: {}]
  %s2 = inlined_call_operand.vmem [shape: bf16[64,128], index: 2, kind: input, shape index: {}]
  %s3 = inlined_call_operand.vmem [shape: f32[1,128], index: 3, kind: input, shape index: {}]
  %s4 = inlined_call_operand.vmem [shape: bf16[2,128,128], index: 4, kind: input, shape index: {}]
  %s5 = inlined_call_operand.vmem [shape: s8[128,128], index: 5, kind: input, shape index: {}]
  %s6 = inlined_call_operand.vmem [shape: bf16[128,128], index: 6, kind: input, shape index: {}]
  %s7 = inlined_call_operand.vmem [shape: f32[1,128], index: 7, kind: input, shape index: {}]
  %s8 = inlined_call_operand.vmem [shape: f32[128,128], index: 8, kind: output, shape index: {}]
  %s9 = sld [smem:[#allocation0]]
  $region46: #{net_forward.1} parent=0
    _
  %s11 = ssub.s32 1, %s9
  %s12 = scalar_select 0, %s11, %s9
  $region1: #{net_forward.1} parent=0
    #allocation2 [shape = 'u8[512]{0}', space=smem, size = 0x200, scoped, tag = 'input window, operand 0, single buffered']
    #allocation3 [shape = 's32[1]{0}', space=sflag, size = 0x4, scoped, tag = 'scoped memory for net_forward.1']
    %13 = vsyncpa [#allocation3], 0
    // Predicated region
    $region2: #{net_forward.1} parent=1 // pred_check
      _
    $region3: #{net_forward.1} parent=1 // pred_check_branch
      %15 = sbr.rel (0) target = $region5
    $region4: #{net_forward.1} parent=1 // pred_region
      %s17 = ssub.s32 16, 16
      %18 = vsyncadd [#allocation3], %s17
      %s20 = sshll.u32 %s0, 4
      %s21 = int_to_ptr.vmem [resolvable:$true] %s20
      %23 = dma.vmem_to_smem %s21, 16, [#allocation2], [#allocation3]
    $region5: #{net_forward.1} parent=1 // pred_fallthru
      _
    // Predicated region
    $region6: #{net_forward.1} parent=1 // pred_check
      _
    $region7: #{net_forward.1} parent=1 // pred_check_branch
      %25 = sbr.rel (0) target = $region9
    $region8: #{net_forward.1} parent=1 // pred_region
      _
    $region9: #{net_forward.1} parent=1 // pred_fallthru
      _
    // Predicated region
    $region10: #{net_forward.1} parent=1 // pred_check
      _
    $region11: #{net_forward.1} parent=1 // pred_check_branch
      %27 = sbr.rel (0) target = $region13
    $region12: #{net_forward.1} parent=1 // pred_region
      _
    $region13: #{net_forward.1} parent=1 // pred_fallthru
      _
    // Predicated region
    $region14: #{net_forward.1} parent=1 // pred_check
      _
    $region15: #{net_forward.1} parent=1 // pred_check_branch
      %29 = sbr.rel (0) target = $region17
    $region16: #{net_forward.1} parent=1 // pred_region
      _
    $region17: #{net_forward.1} parent=1 // pred_fallthru
      _
    // Predicated region
    $region18: #{net_forward.1} parent=1 // pred_check
      _
    $region19: #{net_forward.1} parent=1 // pred_check_branch
      %31 = sbr.rel (0) target = $region21
    $region20: #{net_forward.1} parent=1 // pred_region
      _
    $region21: #{net_forward.1} parent=1 // pred_fallthru
      _
    // Predicated region
    $region22: #{net_forward.1} parent=1 // pred_check
      _
    $region23: #{net_forward.1} parent=1 // pred_check_branch
      %33 = sbr.rel (0) target = $region25
    $region24: #{net_forward.1} parent=1 // pred_region
      _
    $region25: #{net_forward.1} parent=1 // pred_fallthru
      _
    // Predicated region
    $region26: #{net_forward.1} parent=1 // pred_check
      _
    $region27: #{net_forward.1} parent=1 // pred_check_branch
      %35 = sbr.rel (0) target = $region29
    $region28: #{net_forward.1} parent=1 // pred_region
      _
    $region29: #{net_forward.1} parent=1 // pred_fallthru
      _
    // Predicated region
    $region30: #{net_forward.1} parent=1 // pred_check
      _
    $region31: #{net_forward.1} parent=1 // pred_check_branch
      %37 = sbr.rel (0) target = $region33
    $region32: #{net_forward.1} parent=1 // pred_region
      _
    $region33: #{net_forward.1} parent=1 // pred_fallthru
      _
    // Predicated region
    $region34: #{net_forward.1} parent=1 // pred_check
      _
    $region35: #{net_forward.1} parent=1 // pred_check_branch
      %39 = sbr.rel (0) target = $region37
    $region36: #{net_forward.1} parent=1 // pred_region
      %40 = dma.done [#allocation3], 16
    $region37: #{net_forward.1} parent=1 // pred_fallthru
      _
    %41 = sfence
    %v45 = vld [vmem:[%s1] sm:$0xf]
    %v46 = vld [vmem:[%s1 + $0x4] sm:$0xf]
    %v47 = vld [vmem:[%s1 + $0x8] sm:$0xf]
    %v48 = vld [vmem:[%s1 + $0xc] sm:$0xf]
    %v49 = vld [vmem:[%s1 + $0x10] sm:$0xf]
    %v50 = vld [vmem:[%s1 + $0x14] sm:$0xf]
    %v51 = vld [vmem:[%s1 + $0x18] sm:$0xf]
    %v52 = vld [vmem:[%s1 + $0x1c] sm:$0xf]
    %v53 = vld [vmem:[%s1 + $0x20] sm:$0xf]
    %v54 = vld [vmem:[%s1 + $0x24] sm:$0xf]
    %v55 = vld [vmem:[%s1 + $0x28] sm:$0xf]
    %v56 = vld [vmem:[%s1 + $0x2c] sm:$0xf]
    %v57 = vld [vmem:[%s1 + $0x30] sm:$0xf]
    %v58 = vld [vmem:[%s1 + $0x34] sm:$0xf]
    %v59 = vld [vmem:[%s1 + $0x38] sm:$0xf]
    %v60 = vld [vmem:[%s1 + $0x3c] sm:$0xf]
    %v61 = vld [vmem:[%s2] sm:$0xf]
    %v62 = vld [vmem:[%s2 + $0x4] sm:$0xf]
    %v63 = vld [vmem:[%s2 + $0x8] sm:$0xf]
    %v64 = vld [vmem:[%s2 + $0xc] sm:$0xf]
    %v65 = vld [vmem:[%s2 + $0x10] sm:$0xf]
    %v66 = vld [vmem:[%s2 + $0x14] sm:$0xf]
    %v67 = vld [vmem:[%s2 + $0x18] sm:$0xf]
    %v68 = vld [vmem:[%s2 + $0x1c] sm:$0xf]
    %v69 = vld [vmem:[%s3] sm:$0x1]
    %v71 = vlaneseq
    %v72 = vshrl.u32 %v71, 7
    %v73 = vsub.s32 0, %v72
    %v74 = vrot.slane %v69, %v73
    %v92 = vunpack.c.l.b16 %v45
    %v93 = vunpack.c.l.b16 %v46
    %v94 = vunpack.c.l.b16 %v47
    %v95 = vunpack.c.l.b16 %v48
    %v96 = vunpack.c.l.b16 %v49
    %v97 = vunpack.c.l.b16 %v50
    %v98 = vunpack.c.l.b16 %v51
    %v99 = vunpack.c.l.b16 %v52
    %v100 = vunpack.c.l.b16 %v53
    %v101 = vunpack.c.l.b16 %v54
    %v102 = vunpack.c.l.b16 %v55
    %v103 = vunpack.c.l.b16 %v56
    %v104 = vunpack.c.l.b16 %v57
    %v105 = vunpack.c.l.b16 %v58
    %v106 = vunpack.c.l.b16 %v59
    %v107 = vunpack.c.l.b16 %v60
    %v108 = vpack.c.b16 %v93, %v92
    %v109 = vpack.c.b16 %v95, %v94
    %v110 = vpack.c.b16 %v97, %v96
    %v111 = vpack.c.b16 %v99, %v98
    %v112 = vpack.c.b16 %v101, %v100
    %v113 = vpack.c.b16 %v103, %v102
    %v114 = vpack.c.b16 %v105, %v104
    %v115 = vpack.c.b16 %v107, %v106
    %v124 = vunpack.c.l.b16 %v61
    %v125 = vunpack.c.l.b16 %v62
    %v126 = vunpack.c.l.b16 %v63
    %v127 = vunpack.c.l.b16 %v64
    %v128 = vunpack.c.l.b16 %v65
    %v129 = vunpack.c.l.b16 %v66
    %v130 = vunpack.c.l.b16 %v67
    %v131 = vunpack.c.l.b16 %v68
    %v132 = vpack.c.b16 %v125, %v124
    %v133 = vpack.c.b16 %v127, %v126
    %v134 = vpack.c.b16 %v129, %v128
    %v135 = vpack.c.b16 %v131, %v130
    %vm140 = vcmask 523264
    %v142 = vsel %vm140, %v108, 0
    %v145 = vsel %vm140, %v109, 0
    %v148 = vsel %vm140, %v110, 0
    %v151 = vsel %vm140, %v111, 0
    %v154 = vsel %vm140, %v112, 0
    %v157 = vsel %vm140, %v113, 0
    %v160 = vsel %vm140, %v114, 0
    %v163 = vsel %vm140, %v115, 0
    %165 = vmatprep.subr.bf16.mxu0 0
    %166 = vmatpush1.bf16.msra.mxu0 %v132
    %167 = vmatprep.subr.bf16.mxu0 0
    %168 = vmatpush1.bf16.msra.mxu0 %v133
    %169 = vmatprep.subr.bf16.mxu0 0
    %170 = vmatpush1.bf16.msra.mxu0 %v134
    %171 = vmatprep.subr.bf16.mxu0 0
    %172 = vmatpush1.bf16.msra.mxu0 %v135
    %173 = vmatprep.subr.bf16.mxu0 0
    %174 = vmatpush1.bf16.msra.mxu0 0
    %175 = vmatprep.subr.bf16.mxu0 0
    %176 = vmatpush1.bf16.msra.mxu0 0
    %177 = vmatprep.subr.bf16.mxu0 0
    %178 = vmatpush1.bf16.msra.mxu0 0
    %179 = vmatprep.subr.bf16.mxu0 0
    %180 = vmatpush1.bf16.msra.mxu0 0
    %181 = vmatprep.subr.bf16.mxu0 0
    %182 = vmatpush1.bf16.msra.mxu0 0
    %183 = vmatprep.subr.bf16.mxu0 0
    %184 = vmatpush1.bf16.msra.mxu0 0
    %185 = vmatprep.subr.bf16.mxu0 0
    %186 = vmatpush1.bf16.msra.mxu0 0
    %187 = vmatprep.subr.bf16.mxu0 0
    %188 = vmatpush1.bf16.msra.mxu0 0
    %189 = vmatprep.subr.bf16.mxu0 0
    %190 = vmatpush1.bf16.msra.mxu0 0
    %191 = vmatprep.subr.bf16.mxu0 0
    %192 = vmatpush1.bf16.msra.mxu0 0
    %193 = vmatprep.subr.bf16.mxu0 0
    %194 = vmatpush1.bf16.msra.mxu0 0
    %195 = vmatprep.subr.bf16.mxu0 0
    %196 = vmatpush1.bf16.msra.mxu0 0
    %197 = vmatprep.mubr.bf16.mxu0 0
    %198 = vmatmul.mubr.bf16.gmra.mrb[0].mxu0 %v142
    %v199 = vpop.f32.mrb[0].mxu0
    %v200 = vadd.f32 %v74, %v199
    %v201 = vpop.f32.mrb[0].mxu0
    %v202 = vpop.f32.mrb[0].mxu0
    %v203 = vadd.f32 %v74, %v202
    %v204 = vpop.f32.mrb[0].mxu0
    %205 = vmatprep.mubr.bf16.mxu0 0
    %206 = vmatmul.mubr.bf16.gmra.mrb[0].mxu0 %v145
    %v207 = vpop.f32.mrb[0].mxu0
    %v208 = vadd.f32 %v74, %v207
    %v209 = vpop.f32.mrb[0].mxu0
    %v210 = vpop.f32.mrb[0].mxu0
    %v211 = vadd.f32 %v74, %v210
    %v212 = vpop.f32.mrb[0].mxu0
    %213 = vmatprep.mubr.bf16.mxu0 0
    %214 = vmatmul.mubr.bf16.gmra.mrb[0].mxu0 %v148
    %v215 = vpop.f32.mrb[0].mxu0
    %v216 = vadd.f32 %v74, %v215
    %v217 = vpop.f32.mrb[0].mxu0
    %v218 = vpop.f32.mrb[0].mxu0
    %v219 = vadd.f32 %v74, %v218
    %v220 = vpop.f32.mrb[0].mxu0
    %221 = vmatprep.mubr.bf16.mxu0 0
    %222 = vmatmul.mubr.bf16.gmra.mrb[0].mxu0 %v151
    %v223 = vpop.f32.mrb[0].mxu0
    %v224 = vadd.f32 %v74, %v223
    %v225 = vpop.f32.mrb[0].mxu0
    %v226 = vpop.f32.mrb[0].mxu0
    %v227 = vadd.f32 %v74, %v226
    %v228 = vpop.f32.mrb[0].mxu0
    %229 = vmatprep.mubr.bf16.mxu0 0
    %230 = vmatmul.mubr.bf16.gmra.mrb[0].mxu0 %v154
    %v231 = vpop.f32.mrb[0].mxu0
    %v232 = vadd.f32 %v74, %v231
    %v233 = vpop.f32.mrb[0].mxu0
    %v234 = vpop.f32.mrb[0].mxu0
    %v235 = vadd.f32 %v74, %v234
    %v236 = vpop.f32.mrb[0].mxu0
    %237 = vmatprep.mubr.bf16.mxu0 0
    %238 = vmatmul.mubr.bf16.gmra.mrb[0].mxu0 %v157
    %v239 = vpop.f32.mrb[0].mxu0
    %v240 = vadd.f32 %v74, %v239
    %v241 = vpop.f32.mrb[0].mxu0
    %v242 = vpop.f32.mrb[0].mxu0
    %v243 = vadd.f32 %v74, %v242
    %v244 = vpop.f32.mrb[0].mxu0
    %245 = vmatprep.mubr.bf16.mxu0 0
    %246 = vmatmul.mubr.bf16.gmra.mrb[0].mxu0 %v160
    %v247 = vpop.f32.mrb[0].mxu0
    %v248 = vadd.f32 %v74, %v247
    %v249 = vpop.f32.mrb[0].mxu0
    %v250 = vpop.f32.mrb[0].mxu0
    %v251 = vadd.f32 %v74, %v250
    %v252 = vpop.f32.mrb[0].mxu0
    %253 = vmatprep.mubr.bf16.mxu0 0
    %254 = vmatmul.mubr.bf16.gmra.mrb[0].mxu0 %v163
    %v255 = vpop.f32.mrb[0].mxu0
    %v256 = vadd.f32 %v74, %v255
    %v257 = vpop.f32.mrb[0].mxu0
    %v258 = vpop.f32.mrb[0].mxu0
    %v259 = vadd.f32 %v74, %v258
    %v260 = vpop.f32.mrb[0].mxu0
    %261 = vdwg.mxu0
    %v262 = vmax.f32 %v200, 0.0
    %v263 = vmax.f32 %v203, 0.0
    %v264 = vmax.f32 %v208, 0.0
    %v265 = vmax.f32 %v211, 0.0
    %v266 = vmax.f32 %v216, 0.0
    %v267 = vmax.f32 %v219, 0.0
    %v268 = vmax.f32 %v224, 0.0
    %v269 = vmax.f32 %v227, 0.0
    %v270 = vmax.f32 %v232, 0.0
    %v271 = vmax.f32 %v235, 0.0
    %v272 = vmax.f32 %v240, 0.0
    %v273 = vmax.f32 %v243, 0.0
    %v274 = vmax.f32 %v248, 0.0
    %v275 = vmax.f32 %v251, 0.0
    %v276 = vmax.f32 %v256, 0.0
    %v277 = vmax.f32 %v259, 0.0
    %v278 = vpack.c.bf16 %v263, %v262
    %v279 = vpack.c.bf16 %v265, %v264
    %v280 = vpack.c.bf16 %v267, %v266
    %v281 = vpack.c.bf16 %v269, %v268
    %v282 = vpack.c.bf16 %v271, %v270
    %v283 = vpack.c.bf16 %v273, %v272
    %v284 = vpack.c.bf16 %v275, %v274
    %v285 = vpack.c.bf16 %v277, %v276
    %s286 = sld [smem:[#allocation2]]
    %v287 = vld [vmem:[%s4] sm:$0xf]
    %v288 = vld [vmem:[%s4 + $0x4] sm:$0xf]
    %v289 = vld [vmem:[%s4 + $0x8] sm:$0xf]
    %v290 = vld [vmem:[%s4 + $0xc] sm:$0xf]
    %v291 = vld [vmem:[%s4 + $0x10] sm:$0xf]
    %v292 = vld [vmem:[%s4 + $0x14] sm:$0xf]
    %v293 = vld [vmem:[%s4 + $0x18] sm:$0xf]
    %v294 = vld [vmem:[%s4 + $0x1c] sm:$0xf]
    %v295 = vld [vmem:[%s4 + $0x20] sm:$0xf]
    %v296 = vld [vmem:[%s4 + $0x24] sm:$0xf]
    %v297 = vld [vmem:[%s4 + $0x28] sm:$0xf]
    %v298 = vld [vmem:[%s4 + $0x2c] sm:$0xf]
    %v299 = vld [vmem:[%s4 + $0x30] sm:$0xf]
    %v300 = vld [vmem:[%s4 + $0x34] sm:$0xf]
    %v301 = vld [vmem:[%s4 + $0x38] sm:$0xf]
    %v302 = vld [vmem:[%s4 + $0x3c] sm:$0xf]
    %v319 = vunpack.c.l.b16 %v287
    %v320 = vunpack.c.l.b16 %v288
    %v321 = vunpack.c.l.b16 %v289
    %v322 = vunpack.c.l.b16 %v290
    %v323 = vunpack.c.l.b16 %v291
    %v324 = vunpack.c.l.b16 %v292
    %v325 = vunpack.c.l.b16 %v293
    %v326 = vunpack.c.l.b16 %v294
    %v327 = vunpack.c.l.b16 %v295
    %v328 = vunpack.c.l.b16 %v296
    %v329 = vunpack.c.l.b16 %v297
    %v330 = vunpack.c.l.b16 %v298
    %v331 = vunpack.c.l.b16 %v299
    %v332 = vunpack.c.l.b16 %v300
    %v333 = vunpack.c.l.b16 %v301
    %v334 = vunpack.c.l.b16 %v302
    %v335 = vpack.c.b16 %v320, %v319
    %v336 = vpack.c.b16 %v322, %v321
    %v337 = vpack.c.b16 %v324, %v323
    %v338 = vpack.c.b16 %v326, %v325
    %v339 = vpack.c.b16 %v328, %v327
    %v340 = vpack.c.b16 %v330, %v329
    %v341 = vpack.c.b16 %v332, %v331
    %v342 = vpack.c.b16 %v334, %v333
    %351 = vmatprep.subr.bf16.mxu0 0
    %352 = vmatpush1.bf16.msra.mxu0 %v335
    %353 = vmatprep.subr.bf16.mxu0 0
    %354 = vmatpush1.bf16.msra.mxu0 %v336
    %355 = vmatprep.subr.bf16.mxu0 0
    %356 = vmatpush1.bf16.msra.mxu0 %v337
    %357 = vmatprep.subr.bf16.mxu0 0
    %358 = vmatpush1.bf16.msra.mxu0 %v338
    %359 = vmatprep.subr.bf16.mxu0 0
    %360 = vmatpush1.bf16.msra.mxu0 %v339
    %361 = vmatprep.subr.bf16.mxu0 0
    %362 = vmatpush1.bf16.msra.mxu0 %v340
    %363 = vmatprep.subr.bf16.mxu0 0
    %364 = vmatpush1.bf16.msra.mxu0 %v341
    %365 = vmatprep.subr.bf16.mxu0 0
    %366 = vmatpush1.bf16.msra.mxu0 %v342
    %367 = vmatprep.subr.bf16.mxu0 0
    %368 = vmatpush1.bf16.msra.mxu0 0
    %369 = vmatprep.subr.bf16.mxu0 0
    %370 = vmatpush1.bf16.msra.mxu0 0
    %371 = vmatprep.subr.bf16.mxu0 0
    %372 = vmatpush1.bf16.msra.mxu0 0
    %373 = vmatprep.subr.bf16.mxu0 0
    %374 = vmatpush1.bf16.msra.mxu0 0
    %375 = vmatprep.subr.bf16.mxu0 0
    %376 = vmatpush1.bf16.msra.mxu0 0
    %377 = vmatprep.subr.bf16.mxu0 0
    %378 = vmatpush1.bf16.msra.mxu0 0
    %379 = vmatprep.subr.bf16.mxu0 0
    %380 = vmatpush1.bf16.msra.mxu0 0
    %381 = vmatprep.subr.bf16.mxu0 0
    %382 = vmatpush1.bf16.msra.mxu0 0
    %383 = vmatprep.mubr.bf16.mxu0 0
    %384 = vmatmul.mubr.bf16.gmra.mrb[0].mxu0 %v278
    %v385 = vpop.f32.mrb[0].mxu0
    %v386 = vadd.f32 0.0, %v385
    %v387 = vpop.f32.mrb[0].mxu0
    %v388 = vpop.f32.mrb[0].mxu0
    %v389 = vadd.f32 0.0, %v388
    %v390 = vpop.f32.mrb[0].mxu0
    %391 = vmatprep.mubr.bf16.mxu0 0
    %392 = vmatmul.mubr.bf16.gmra.mrb[0].mxu0 %v279
    %v393 = vpop.f32.mrb[0].mxu0
    %v394 = vadd.f32 0.0, %v393
    %v395 = vpop.f32.mrb[0].mxu0
    %v396 = vpop.f32.mrb[0].mxu0
    %v397 = vadd.f32 0.0, %v396
    %v398 = vpop.f32.mrb[0].mxu0
    %399 = vmatprep.mubr.bf16.mxu0 0
    %400 = vmatmul.mubr.bf16.gmra.mrb[0].mxu0 %v280
    %v401 = vpop.f32.mrb[0].mxu0
    %v402 = vadd.f32 0.0, %v401
    %v403 = vpop.f32.mrb[0].mxu0
    %v404 = vpop.f32.mrb[0].mxu0
    %v405 = vadd.f32 0.0, %v404
    %v406 = vpop.f32.mrb[0].mxu0
    %407 = vmatprep.mubr.bf16.mxu0 0
    %408 = vmatmul.mubr.bf16.gmra.mrb[0].mxu0 %v281
    %v409 = vpop.f32.mrb[0].mxu0
    %v410 = vadd.f32 0.0, %v409
    %v411 = vpop.f32.mrb[0].mxu0
    %v412 = vpop.f32.mrb[0].mxu0
    %v413 = vadd.f32 0.0, %v412
    %v414 = vpop.f32.mrb[0].mxu0
    %415 = vmatprep.mubr.bf16.mxu0 0
    %416 = vmatmul.mubr.bf16.gmra.mrb[0].mxu0 %v282
    %v417 = vpop.f32.mrb[0].mxu0
    %v418 = vadd.f32 0.0, %v417
    %v419 = vpop.f32.mrb[0].mxu0
    %v420 = vpop.f32.mrb[0].mxu0
    %v421 = vadd.f32 0.0, %v420
    %v422 = vpop.f32.mrb[0].mxu0
    %423 = vmatprep.mubr.bf16.mxu0 0
    %424 = vmatmul.mubr.bf16.gmra.mrb[0].mxu0 %v283
    %v425 = vpop.f32.mrb[0].mxu0
    %v426 = vadd.f32 0.0, %v425
    %v427 = vpop.f32.mrb[0].mxu0
    %v428 = vpop.f32.mrb[0].mxu0
    %v429 = vadd.f32 0.0, %v428
    %v430 = vpop.f32.mrb[0].mxu0
    %431 = vmatprep.mubr.bf16.mxu0 0
    %432 = vmatmul.mubr.bf16.gmra.mrb[0].mxu0 %v284
    %v433 = vpop.f32.mrb[0].mxu0
    %v434 = vadd.f32 0.0, %v433
    %v435 = vpop.f32.mrb[0].mxu0
    %v436 = vpop.f32.mrb[0].mxu0
    %v437 = vadd.f32 0.0, %v436
    %v438 = vpop.f32.mrb[0].mxu0
    %439 = vmatprep.mubr.bf16.mxu0 0
    %440 = vmatmul.mubr.bf16.gmra.mrb[0].mxu0 %v285
    %v441 = vpop.f32.mrb[0].mxu0
    %v442 = vadd.f32 0.0, %v441
    %v443 = vpop.f32.mrb[0].mxu0
    %v444 = vpop.f32.mrb[0].mxu0
    %v445 = vadd.f32 0.0, %v444
    %v446 = vpop.f32.mrb[0].mxu0
    %447 = vdwg.mxu0
    %v448 = vpack.c.bf16 %v389, %v386
    %v449 = vpack.c.bf16 %v397, %v394
    %v450 = vpack.c.bf16 %v405, %v402
    %v451 = vpack.c.bf16 %v413, %v410
    %v452 = vpack.c.bf16 %v421, %v418
    %v453 = vpack.c.bf16 %v429, %v426
    %v454 = vpack.c.bf16 %v437, %v434
    %v455 = vpack.c.bf16 %v445, %v442
    %456 = vmatprep.subr.bf16.mxu0 0
    %457 = vmatpush1.bf16.xpose.msra.mxu0 %v448
    %458 = vmatprep.subr.bf16.mxu0 0
    %459 = vmatpush1.bf16.xpose.msra.mxu0 %v449
    %460 = vmatprep.subr.bf16.mxu0 0
    %461 = vmatpush1.bf16.xpose.msra.mxu0 %v450
    %462 = vmatprep.subr.bf16.mxu0 0
    %463 = vmatpush1.bf16.xpose.msra.mxu0 %v451
    %464 = vmatprep.subr.bf16.mxu0 0
    %465 = vmatpush1.bf16.xpose.msra.mxu0 %v452
    %466 = vmatprep.subr.bf16.mxu0 0
    %467 = vmatpush1.bf16.xpose.msra.mxu0 %v453
    %468 = vmatprep.subr.bf16.mxu0 0
    %469 = vmatpush1.bf16.xpose.msra.mxu0 %v454
    %470 = vmatprep.subr.bf16.mxu0 0
    %471 = vmatpush1.bf16.xpose.msra.mxu0 %v455
    %472 = vmatprep.subr.bf16.mxu0 0
    %473 = vmatpush1.bf16.xpose.msra.mxu0 0
    %474 = vmatprep.subr.bf16.mxu0 0
    %475 = vmatpush1.bf16.xpose.msra.mxu0 0
    %476 = vmatprep.subr.bf16.mxu0 0
    %477 = vmatpush1.bf16.xpose.msra.mxu0 0
    %478 = vmatprep.subr.bf16.mxu0 0
    %479 = vmatpush1.bf16.xpose.msra.mxu0 0
    %480 = vmatprep.subr.bf16.mxu0 0
    %481 = vmatpush1.bf16.xpose.msra.mxu0 0
    %482 = vmatprep.subr.bf16.mxu0 0
    %483 = vmatpush1.bf16.xpose.msra.mxu0 0
    %484 = vmatprep.subr.bf16.mxu0 0
    %485 = vmatpush1.bf16.xpose.msra.mxu0 0
    %486 = vmatprep.subr.bf16.mxu0 0
    %487 = vmatpush1.bf16.xpose.msra.mxu0 0
    %488 = vmatprep.mubr.bf16.mxu0 0
    %489 = vmatmul.mubr.bf16.gmra.mrb[0].mxu0 %v448
    %v490 = vpop.f32.mrb[0].mxu0
    %v491 = vadd.f32 0.0, %v490
    %v492 = vpop.f32.mrb[0].mxu0
    %v493 = vpop.f32.mrb[0].mxu0
    %v494 = vadd.f32 0.0, %v493
    %v495 = vpop.f32.mrb[0].mxu0
    %496 = vmatprep.mubr.bf16.mxu0 0
    %497 = vmatmul.mubr.bf16.gmra.mrb[0].mxu0 %v449
    %v498 = vpop.f32.mrb[0].mxu0
    %v499 = vadd.f32 0.0, %v498
    %v500 = vpop.f32.mrb[0].mxu0
    %v501 = vpop.f32.mrb[0].mxu0
    %v502 = vadd.f32 0.0, %v501
    %v503 = vpop.f32.mrb[0].mxu0
    %504 = vmatprep.mubr.bf16.mxu0 0
    %505 = vmatmul.mubr.bf16.gmra.mrb[0].mxu0 %v450
    %v506 = vpop.f32.mrb[0].mxu0
    %v507 = vadd.f32 0.0, %v506
    %v508 = vpop.f32.mrb[0].mxu0
    %v509 = vpop.f32.mrb[0].mxu0
    %v510 = vadd.f32 0.0, %v509
    %v511 = vpop.f32.mrb[0].mxu0
    %512 = vmatprep.mubr.bf16.mxu0 0
    %513 = vmatmul.mubr.bf16.gmra.mrb[0].mxu0 %v451
    %v514 = vpop.f32.mrb[0].mxu0
    %v515 = vadd.f32 0.0, %v514
    %v516 = vpop.f32.mrb[0].mxu0
    %v517 = vpop.f32.mrb[0].mxu0
    %v518 = vadd.f32 0.0, %v517
    %v519 = vpop.f32.mrb[0].mxu0
    %520 = vmatprep.mubr.bf16.mxu0 0
    %521 = vmatmul.mubr.bf16.gmra.mrb[0].mxu0 %v452
    %v522 = vpop.f32.mrb[0].mxu0
    %v523 = vadd.f32 0.0, %v522
    %v524 = vpop.f32.mrb[0].mxu0
    %v525 = vpop.f32.mrb[0].mxu0
    %v526 = vadd.f32 0.0, %v525
    %v527 = vpop.f32.mrb[0].mxu0
    %528 = vmatprep.mubr.bf16.mxu0 0
    %529 = vmatmul.mubr.bf16.gmra.mrb[0].mxu0 %v453
    %v530 = vpop.f32.mrb[0].mxu0
    %v531 = vadd.f32 0.0, %v530
    %v532 = vpop.f32.mrb[0].mxu0
    %v533 = vpop.f32.mrb[0].mxu0
    %v534 = vadd.f32 0.0, %v533
    %v535 = vpop.f32.mrb[0].mxu0
    %536 = vmatprep.mubr.bf16.mxu0 0
    %537 = vmatmul.mubr.bf16.gmra.mrb[0].mxu0 %v454
    %v538 = vpop.f32.mrb[0].mxu0
    %v539 = vadd.f32 0.0, %v538
    %v540 = vpop.f32.mrb[0].mxu0
    %v541 = vpop.f32.mrb[0].mxu0
    %v542 = vadd.f32 0.0, %v541
    %v543 = vpop.f32.mrb[0].mxu0
    %544 = vmatprep.mubr.bf16.mxu0 0
    %545 = vmatmul.mubr.bf16.gmra.mrb[0].mxu0 %v455
    %v546 = vpop.f32.mrb[0].mxu0
    %v547 = vadd.f32 0.0, %v546
    %v548 = vpop.f32.mrb[0].mxu0
    %v549 = vpop.f32.mrb[0].mxu0
    %v550 = vadd.f32 0.0, %v549
    %v551 = vpop.f32.mrb[0].mxu0
    %552 = vdwg.mxu0
    %v553 = vmul.f32 %v386, %v386
    %v554 = vmul.f32 %v389, %v389
    %v555 = vmul.f32 %v394, %v394
    %v556 = vmul.f32 %v397, %v397
    %v557 = vmul.f32 %v402, %v402
    %v558 = vmul.f32 %v405, %v405
    %v559 = vmul.f32 %v410, %v410
    %v560 = vmul.f32 %v413, %v413
    %v561 = vmul.f32 %v418, %v418
    %v562 = vmul.f32 %v421, %v421
    %v563 = vmul.f32 %v426, %v426
    %v564 = vmul.f32 %v429, %v429
    %v565 = vmul.f32 %v434, %v434
    %v566 = vmul.f32 %v437, %v437
    %v567 = vmul.f32 %v442, %v442
    %v568 = vmul.f32 %v445, %v445
    %569 = vadd.xlane.f32.xlu0 %v553
    %v570 = vpop.xlane.xlu0 %569
    %571 = vadd.xlane.f32.xlu0 %v554
    %v572 = vpop.xlane.xlu0 %571
    %573 = vadd.xlane.f32.xlu0 %v555
    %v574 = vpop.xlane.xlu0 %573
    %575 = vadd.xlane.f32.xlu0 %v556
    %v576 = vpop.xlane.xlu0 %575
    %577 = vadd.xlane.f32.xlu0 %v557
    %v578 = vpop.xlane.xlu0 %577
    %579 = vadd.xlane.f32.xlu0 %v558
    %v580 = vpop.xlane.xlu0 %579
    %581 = vadd.xlane.f32.xlu0 %v559
    %v582 = vpop.xlane.xlu0 %581
    %583 = vadd.xlane.f32.xlu0 %v560
    %v584 = vpop.xlane.xlu0 %583
    %585 = vadd.xlane.f32.xlu0 %v561
    %v586 = vpop.xlane.xlu0 %585
    %587 = vadd.xlane.f32.xlu0 %v562
    %v588 = vpop.xlane.xlu0 %587
    %589 = vadd.xlane.f32.xlu0 %v563
    %v590 = vpop.xlane.xlu0 %589
    %591 = vadd.xlane.f32.xlu0 %v564
    %v592 = vpop.xlane.xlu0 %591
    %593 = vadd.xlane.f32.xlu0 %v565
    %v594 = vpop.xlane.xlu0 %593
    %595 = vadd.xlane.f32.xlu0 %v566
    %v596 = vpop.xlane.xlu0 %595
    %597 = vadd.xlane.f32.xlu0 %v567
    %v598 = vpop.xlane.xlu0 %597
    %599 = vadd.xlane.f32.xlu0 %v568
    %v600 = vpop.xlane.xlu0 %599
    %v601 = vadd.f32 %v570, 1e-12
    %v602 = vadd.f32 %v572, 1e-12
    %v603 = vadd.f32 %v574, 1e-12
    %v604 = vadd.f32 %v576, 1e-12
    %v605 = vadd.f32 %v578, 1e-12
    %v606 = vadd.f32 %v580, 1e-12
    %v607 = vadd.f32 %v582, 1e-12
    %v608 = vadd.f32 %v584, 1e-12
    %v609 = vadd.f32 %v586, 1e-12
    %v610 = vadd.f32 %v588, 1e-12
    %v611 = vadd.f32 %v590, 1e-12
    %v612 = vadd.f32 %v592, 1e-12
    %v613 = vadd.f32 %v594, 1e-12
    %v614 = vadd.f32 %v596, 1e-12
    %v615 = vadd.f32 %v598, 1e-12
    %v616 = vadd.f32 %v600, 1e-12
    %v617 = vrsqrt.pop %v601
    %v618 = vrsqrt.pop %v602
    %v619 = vrsqrt.pop %v603
    %v620 = vrsqrt.pop %v604
    %v621 = vrsqrt.pop %v605
    %v622 = vrsqrt.pop %v606
    %v623 = vrsqrt.pop %v607
    %v624 = vrsqrt.pop %v608
    %v625 = vrsqrt.pop %v609
    %v626 = vrsqrt.pop %v610
    %v627 = vrsqrt.pop %v611
    %v628 = vrsqrt.pop %v612
    %v629 = vrsqrt.pop %v613
    %v630 = vrsqrt.pop %v614
    %v631 = vrsqrt.pop %v615
    %v632 = vrsqrt.pop %v616
    %633 = vmatprep.subr.mxu0 0.0
    %634 = vmatpush1.xpose.msra.mxu0 %v553
    %635 = vmatprep.subr.mxu0 0.0
    %636 = vmatpush1.xpose.msra.mxu0 %v554
    %637 = vmatprep.subr.mxu0 0.0
    %638 = vmatpush1.xpose.msra.mxu0 %v555
    %639 = vmatprep.subr.mxu0 0.0
    %640 = vmatpush1.xpose.msra.mxu0 %v556
    %641 = vmatprep.subr.mxu0 0.0
    %642 = vmatpush1.xpose.msra.mxu0 %v557
    %643 = vmatprep.subr.mxu0 0.0
    %644 = vmatpush1.xpose.msra.mxu0 %v558
    %645 = vmatprep.subr.mxu0 0.0
    %646 = vmatpush1.xpose.msra.mxu0 %v559
    %647 = vmatprep.subr.mxu0 0.0
    %648 = vmatpush1.xpose.msra.mxu0 %v560
    %649 = vmatprep.subr.mxu0 0.0
    %650 = vmatpush1.xpose.msra.mxu0 %v561
    %651 = vmatprep.subr.mxu0 0.0
    %652 = vmatpush1.xpose.msra.mxu0 %v562
    %653 = vmatprep.subr.mxu0 0.0
    %654 = vmatpush1.xpose.msra.mxu0 %v563
    %655 = vmatprep.subr.mxu0 0.0
    %656 = vmatpush1.xpose.msra.mxu0 %v564
    %657 = vmatprep.subr.mxu0 0.0
    %658 = vmatpush1.xpose.msra.mxu0 %v565
    %659 = vmatprep.subr.mxu0 0.0
    %660 = vmatpush1.xpose.msra.mxu0 %v566
    %661 = vmatprep.subr.mxu0 0.0
    %662 = vmatpush1.xpose.msra.mxu0 %v567
    %663 = vmatprep.subr.mxu0 0.0
    %664 = vmatpush1.xpose.msra.mxu0 %v568
    %665 = vmatprep.subr.mxu0 0.0
    %666 = vmatpush1.xpose.msra.mxu0 0.0
    %667 = vmatprep.subr.mxu0 0.0
    %668 = vmatpush1.xpose.msra.mxu0 0.0
    %669 = vmatprep.subr.mxu0 0.0
    %670 = vmatpush1.xpose.msra.mxu0 0.0
    %671 = vmatprep.subr.mxu0 0.0
    %672 = vmatpush1.xpose.msra.mxu0 0.0
    %673 = vmatprep.subr.mxu0 0.0
    %674 = vmatpush1.xpose.msra.mxu0 0.0
    %675 = vmatprep.subr.mxu0 0.0
    %676 = vmatpush1.xpose.msra.mxu0 0.0
    %677 = vmatprep.subr.mxu0 0.0
    %678 = vmatpush1.xpose.msra.mxu0 0.0
    %679 = vmatprep.subr.mxu0 0.0
    %680 = vmatpush1.xpose.msra.mxu0 0.0
    %681 = vmatprep.subr.mxu0 0.0
    %682 = vmatpush1.xpose.msra.mxu0 0.0
    %683 = vmatprep.subr.mxu0 0.0
    %684 = vmatpush1.xpose.msra.mxu0 0.0
    %685 = vmatprep.subr.mxu0 0.0
    %686 = vmatpush1.xpose.msra.mxu0 0.0
    %687 = vmatprep.subr.mxu0 0.0
    %688 = vmatpush1.xpose.msra.mxu0 0.0
    %689 = vmatprep.subr.mxu0 0.0
    %690 = vmatpush1.xpose.msra.mxu0 0.0
    %691 = vmatprep.subr.mxu0 0.0
    %692 = vmatpush1.xpose.msra.mxu0 0.0
    %693 = vmatprep.subr.mxu0 0.0
    %694 = vmatpush1.xpose.msra.mxu0 0.0
    %695 = vmatprep.subr.mxu0 0.0
    %696 = vmatpush1.xpose.msra.mxu0 0.0
    %697 = vmatprep.mubr.f32.mxu0 0.0
    %698 = vmatmul.mubr.f32.gmra.mrb[0].mxu0 1.0
    %v699 = vpop.f32.mrb[0].mxu0
    %v700 = vadd.f32 1e-12, %v699
    %v701 = vpop.f32.mrb[0].mxu0
    %702 = vdwg.mxu0
    %v703 = vrsqrt.pop %v700
    %v704 = vstv %s286
    %v705 = vmul.f32 %v704, %v617
    %v706 = vmul.f32 %v704, %v618
    %v707 = vmul.f32 %v704, %v619
    %v708 = vmul.f32 %v704, %v620
    %v709 = vmul.f32 %v704, %v621
    %v710 = vmul.f32 %v704, %v622
    %v711 = vmul.f32 %v704, %v623
    %v712 = vmul.f32 %v704, %v624
    %v713 = vmul.f32 %v704, %v625
    %v714 = vmul.f32 %v704, %v626
    %v715 = vmul.f32 %v704, %v627
    %v716 = vmul.f32 %v704, %v628
    %v717 = vmul.f32 %v704, %v629
    %v718 = vmul.f32 %v704, %v630
    %v719 = vmul.f32 %v704, %v631
    %v720 = vmul.f32 %v704, %v632
    %v721 = vmul.f32 %v491, %v705
    %v722 = vmul.f32 %v494, %v706
    %v723 = vmul.f32 %v499, %v707
    %v724 = vmul.f32 %v502, %v708
    %v725 = vmul.f32 %v507, %v709
    %v726 = vmul.f32 %v510, %v710
    %v727 = vmul.f32 %v515, %v711
    %v728 = vmul.f32 %v518, %v712
    %v729 = vmul.f32 %v523, %v713
    %v730 = vmul.f32 %v526, %v714
    %v731 = vmul.f32 %v531, %v715
    %v732 = vmul.f32 %v534, %v716
    %v733 = vmul.f32 %v539, %v717
    %v734 = vmul.f32 %v542, %v718
    %v735 = vmul.f32 %v547, %v719
    %v736 = vmul.f32 %v550, %v720
    %v737 = vlaneseq
    %v738 = vshrl.u32 %v737, 7
    %v739 = vsub.s32 0, %v738
    %v740 = vrot.slane %v703, %v739
    %v741 = vmul.f32 %v721, %v740
    %v742 = vmul.f32 %v722, %v740
    %v743 = vmul.f32 %v723, %v740
    %v744 = vmul.f32 %v724, %v740
    %v745 = vmul.f32 %v725, %v740
    %v746 = vmul.f32 %v726, %v740
    %v747 = vmul.f32 %v727, %v740
    %v748 = vmul.f32 %v728, %v740
    %v749 = vmul.f32 %v729, %v740
    %v750 = vmul.f32 %v730, %v740
    %v751 = vmul.f32 %v731, %v740
    %v752 = vmul.f32 %v732, %v740
    %v753 = vmul.f32 %v733, %v740
    %v754 = vmul.f32 %v734, %v740
    %v755 = vmul.f32 %v735, %v740
    %v756 = vmul.f32 %v736, %v740
    %s757 = sand.u32 2147483647, %s286
    %s758 = smin.f32 %s757, 30.0
    %v759 = vld [vmem:[%s5] sm:$0xff]
    %v760 = vld [vmem:[%s5 + $0x8] sm:$0xff]
    %v761 = vld [vmem:[%s5 + $0x10] sm:$0xff]
    %v762 = vld [vmem:[%s5 + $0x18] sm:$0xff]
    %vm763 = vnez %v759
    %vm764 = vnez %v760
    %vm765 = vnez %v761
    %vm766 = vnez %v762
    %v767 = vstv %s758
    %v768 = vsub.f32 %v741, %v767
    %v769 = vsub.f32 %v742, %v767
    %v770 = vsub.f32 %v743, %v767
    %v771 = vsub.f32 %v744, %v767
    %v772 = vsub.f32 %v745, %v767
    %v773 = vsub.f32 %v746, %v767
    %v774 = vsub.f32 %v747, %v767
    %v775 = vsub.f32 %v748, %v767
    %v776 = vsub.f32 %v749, %v767
    %v777 = vsub.f32 %v750, %v767
    %v778 = vsub.f32 %v751, %v767
    %v779 = vsub.f32 %v752, %v767
    %v780 = vsub.f32 %v753, %v767
    %v781 = vsub.f32 %v754, %v767
    %v782 = vsub.f32 %v755, %v767
    %v783 = vsub.f32 %v756, %v767
    %v784 = vmul.f32 %v768, 1.442695
    %v785 = vpow.pop %v784
    %v786 = vmul.f32 %v769, 1.442695
    %v787 = vpow.pop %v786
    %v788 = vmul.f32 %v770, 1.442695
    %v789 = vpow.pop %v788
    %v790 = vmul.f32 %v771, 1.442695
    %v791 = vpow.pop %v790
    %v792 = vmul.f32 %v772, 1.442695
    %v793 = vpow.pop %v792
    %v794 = vmul.f32 %v773, 1.442695
    %v795 = vpow.pop %v794
    %v796 = vmul.f32 %v774, 1.442695
    %v797 = vpow.pop %v796
    %v798 = vmul.f32 %v775, 1.442695
    %v799 = vpow.pop %v798
    %v800 = vmul.f32 %v776, 1.442695
    %v801 = vpow.pop %v800
    %v802 = vmul.f32 %v777, 1.442695
    %v803 = vpow.pop %v802
    %v804 = vmul.f32 %v778, 1.442695
    %v805 = vpow.pop %v804
    %v806 = vmul.f32 %v779, 1.442695
    %v807 = vpow.pop %v806
    %v808 = vmul.f32 %v780, 1.442695
    %v809 = vpow.pop %v808
    %v810 = vmul.f32 %v781, 1.442695
    %v811 = vpow.pop %v810
    %v812 = vmul.f32 %v782, 1.442695
    %v813 = vpow.pop %v812
    %v814 = vmul.f32 %v783, 1.442695
    %v815 = vpow.pop %v814
    %v816 = vsel %vm763, 16843009, 0
    %v817 = vsel %vm764, 16843009, 0
    %v818 = vsel %vm765, 16843009, 0
    %v819 = vsel %vm766, 16843009, 0
    %v820 = vunpack.c.0.s8 %v816
    %v821 = vunpack.c.1.s8 %v816
    %v822 = vunpack.c.2.s8 %v816
    %v823 = vunpack.c.3.s8 %v816
    %v824 = vunpack.c.0.s8 %v817
    %v825 = vunpack.c.1.s8 %v817
    %v826 = vunpack.c.2.s8 %v817
    %v827 = vunpack.c.3.s8 %v817
    %v828 = vunpack.c.0.s8 %v818
    %v829 = vunpack.c.1.s8 %v818
    %v830 = vunpack.c.2.s8 %v818
    %v831 = vunpack.c.3.s8 %v818
    %v832 = vunpack.c.0.s8 %v819
    %v833 = vunpack.c.1.s8 %v819
    %v834 = vunpack.c.2.s8 %v819
    %v835 = vunpack.c.3.s8 %v819
    %v836 = vpack.c.b16 %v820, %v820
    %v837 = vpack.c.b8 %v836, %v836
    %v838 = vpack.c.b16 %v821, %v821
    %v839 = vpack.c.b8 %v838, %v838
    %v840 = vpack.c.b16 %v822, %v822
    %v841 = vpack.c.b8 %v840, %v840
    %v842 = vpack.c.b16 %v823, %v823
    %v843 = vpack.c.b8 %v842, %v842
    %v844 = vpack.c.b16 %v824, %v824
    %v845 = vpack.c.b8 %v844, %v844
    %v846 = vpack.c.b16 %v825, %v825
    %v847 = vpack.c.b8 %v846, %v846
    %v848 = vpack.c.b16 %v826, %v826
    %v849 = vpack.c.b8 %v848, %v848
    %v850 = vpack.c.b16 %v827, %v827
    %v851 = vpack.c.b8 %v850, %v850
    %v852 = vpack.c.b16 %v828, %v828
    %v853 = vpack.c.b8 %v852, %v852
    %v854 = vpack.c.b16 %v829, %v829
    %v855 = vpack.c.b8 %v854, %v854
    %v856 = vpack.c.b16 %v830, %v830
    %v857 = vpack.c.b8 %v856, %v856
    %v858 = vpack.c.b16 %v831, %v831
    %v859 = vpack.c.b8 %v858, %v858
    %v860 = vpack.c.b16 %v832, %v832
    %v861 = vpack.c.b8 %v860, %v860
    %v862 = vpack.c.b16 %v833, %v833
    %v863 = vpack.c.b8 %v862, %v862
    %v864 = vpack.c.b16 %v834, %v834
    %v865 = vpack.c.b8 %v864, %v864
    %v866 = vpack.c.b16 %v835, %v835
    %v867 = vpack.c.b8 %v866, %v866
    %vm868 = vnez %v837
    %vm869 = vnez %v839
    %vm870 = vnez %v841
    %vm871 = vnez %v843
    %vm872 = vnez %v845
    %vm873 = vnez %v847
    %vm874 = vnez %v849
    %vm875 = vnez %v851
    %vm876 = vnez %v853
    %vm877 = vnez %v855
    %vm878 = vnez %v857
    %vm879 = vnez %v859
    %vm880 = vnez %v861
    %vm881 = vnez %v863
    %vm882 = vnez %v865
    %vm883 = vnez %v867
    %v884 = vsel %vm868, 16843009, 0
    %v885 = vsel %vm869, 16843009, 0
    %v886 = vsel %vm870, 16843009, 0
    %v887 = vsel %vm871, 16843009, 0
    %v888 = vsel %vm872, 16843009, 0
    %v889 = vsel %vm873, 16843009, 0
    %v890 = vsel %vm874, 16843009, 0
    %v891 = vsel %vm875, 16843009, 0
    %v892 = vsel %vm876, 16843009, 0
    %v893 = vsel %vm877, 16843009, 0
    %v894 = vsel %vm878, 16843009, 0
    %v895 = vsel %vm879, 16843009, 0
    %v896 = vsel %vm880, 16843009, 0
    %v897 = vsel %vm881, 16843009, 0
    %v898 = vsel %vm882, 16843009, 0
    %v899 = vsel %vm883, 16843009, 0
    %v900 = vunpack.c.0.s8 %v884
    %v901 = vunpack.c.0.s8 %v885
    %v902 = vunpack.c.0.s8 %v886
    %v903 = vunpack.c.0.s8 %v887
    %v904 = vunpack.c.0.s8 %v888
    %v905 = vunpack.c.0.s8 %v889
    %v906 = vunpack.c.0.s8 %v890
    %v907 = vunpack.c.0.s8 %v891
    %v908 = vunpack.c.0.s8 %v892
    %v909 = vunpack.c.0.s8 %v893
    %v910 = vunpack.c.0.s8 %v894
    %v911 = vunpack.c.0.s8 %v895
    %v912 = vunpack.c.0.s8 %v896
    %v913 = vunpack.c.0.s8 %v897
    %v914 = vunpack.c.0.s8 %v898
    %v915 = vunpack.c.0.s8 %v899
    %vm916 = vcmp.ne.s32.totalorder %v900, 0
    %vm917 = vcmp.ne.s32.totalorder %v901, 0
    %vm918 = vcmp.ne.s32.totalorder %v902, 0
    %vm919 = vcmp.ne.s32.totalorder %v903, 0
    %vm920 = vcmp.ne.s32.totalorder %v904, 0
    %vm921 = vcmp.ne.s32.totalorder %v905, 0
    %vm922 = vcmp.ne.s32.totalorder %v906, 0
    %vm923 = vcmp.ne.s32.totalorder %v907, 0
    %vm924 = vcmp.ne.s32.totalorder %v908, 0
    %vm925 = vcmp.ne.s32.totalorder %v909, 0
    %vm926 = vcmp.ne.s32.totalorder %v910, 0
    %vm927 = vcmp.ne.s32.totalorder %v911, 0
    %vm928 = vcmp.ne.s32.totalorder %v912, 0
    %vm929 = vcmp.ne.s32.totalorder %v913, 0
    %vm930 = vcmp.ne.s32.totalorder %v914, 0
    %vm931 = vcmp.ne.s32.totalorder %v915, 0
    %v932 = vsel %vm916, %v785, 0.0
    %v933 = vsel %vm917, %v787, 0.0
    %v934 = vsel %vm918, %v789, 0.0
    %v935 = vsel %vm919, %v791, 0.0
    %v936 = vsel %vm920, %v793, 0.0
    %v937 = vsel %vm921, %v795, 0.0
    %v938 = vsel %vm922, %v797, 0.0
    %v939 = vsel %vm923, %v799, 0.0
    %v940 = vsel %vm924, %v801, 0.0
    %v941 = vsel %vm925, %v803, 0.0
    %v942 = vsel %vm926, %v805, 0.0
    %v943 = vsel %vm927, %v807, 0.0
    %v944 = vsel %vm928, %v809, 0.0
    %v945 = vsel %vm929, %v811, 0.0
    %v946 = vsel %vm930, %v813, 0.0
    %v947 = vsel %vm931, %v815, 0.0
    %948 = vadd.xlane.f32.xlu0 %v932
    %v949 = vpop.xlane.xlu0 %948
    %950 = vadd.xlane.f32.xlu0 %v933
    %v951 = vpop.xlane.xlu0 %950
    %952 = vadd.xlane.f32.xlu0 %v934
    %v953 = vpop.xlane.xlu0 %952
    %954 = vadd.xlane.f32.xlu0 %v935
    %v955 = vpop.xlane.xlu0 %954
    %956 = vadd.xlane.f32.xlu0 %v936
    %v957 = vpop.xlane.xlu0 %956
    %958 = vadd.xlane.f32.xlu0 %v937
    %v959 = vpop.xlane.xlu0 %958
    %960 = vadd.xlane.f32.xlu0 %v938
    %v961 = vpop.xlane.xlu0 %960
    %962 = vadd.xlane.f32.xlu0 %v939
    %v963 = vpop.xlane.xlu0 %962
    %964 = vadd.xlane.f32.xlu0 %v940
    %v965 = vpop.xlane.xlu0 %964
    %966 = vadd.xlane.f32.xlu0 %v941
    %v967 = vpop.xlane.xlu0 %966
    %968 = vadd.xlane.f32.xlu0 %v942
    %v969 = vpop.xlane.xlu0 %968
    %970 = vadd.xlane.f32.xlu0 %v943
    %v971 = vpop.xlane.xlu0 %970
    %972 = vadd.xlane.f32.xlu0 %v944
    %v973 = vpop.xlane.xlu0 %972
    %974 = vadd.xlane.f32.xlu0 %v945
    %v975 = vpop.xlane.xlu0 %974
    %976 = vadd.xlane.f32.xlu0 %v946
    %v977 = vpop.xlane.xlu0 %976
    %978 = vadd.xlane.f32.xlu0 %v947
    %v979 = vpop.xlane.xlu0 %978
    %v980 = vpack.c.bf16 %v933, %v932
    %v981 = vpack.c.bf16 %v935, %v934
    %v982 = vpack.c.bf16 %v937, %v936
    %v983 = vpack.c.bf16 %v939, %v938
    %v984 = vpack.c.bf16 %v941, %v940
    %v985 = vpack.c.bf16 %v943, %v942
    %v986 = vpack.c.bf16 %v945, %v944
    %v987 = vpack.c.bf16 %v947, %v946
    %988 = vmatprep.subr.bf16.mxu0 0
    %989 = vmatpush1.bf16.msra.mxu0 %v448
    %990 = vmatprep.subr.bf16.mxu0 0
    %991 = vmatpush1.bf16.msra.mxu0 %v449
    %992 = vmatprep.subr.bf16.mxu0 0
    %993 = vmatpush1.bf16.msra.mxu0 %v450
    %994 = vmatprep.subr.bf16.mxu0 0
    %995 = vmatpush1.bf16.msra.mxu0 %v451
    %996 = vmatprep.subr.bf16.mxu0 0
    %997 = vmatpush1.bf16.msra.mxu0 %v452
    %998 = vmatprep.subr.bf16.mxu0 0
    %999 = vmatpush1.bf16.msra.mxu0 %v453
    %1000 = vmatprep.subr.bf16.mxu0 0
    %1001 = vmatpush1.bf16.msra.mxu0 %v454
    %1002 = vmatprep.subr.bf16.mxu0 0
    %1003 = vmatpush1.bf16.msra.mxu0 %v455
    %1004 = vmatprep.subr.bf16.mxu0 0
    %1005 = vmatpush1.bf16.msra.mxu0 0
    %1006 = vmatprep.subr.bf16.mxu0 0
    %1007 = vmatpush1.bf16.msra.mxu0 0
    %1008 = vmatprep.subr.bf16.mxu0 0
    %1009 = vmatpush1.bf16.msra.mxu0 0
    %1010 = vmatprep.subr.bf16.mxu0 0
    %1011 = vmatpush1.bf16.msra.mxu0 0
    %1012 = vmatprep.subr.bf16.mxu0 0
    %1013 = vmatpush1.bf16.msra.mxu0 0
    %1014 = vmatprep.subr.bf16.mxu0 0
    %1015 = vmatpush1.bf16.msra.mxu0 0
    %1016 = vmatprep.subr.bf16.mxu0 0
    %1017 = vmatpush1.bf16.msra.mxu0 0
    %1018 = vmatprep.subr.bf16.mxu0 0
    %1019 = vmatpush1.bf16.msra.mxu0 0
    %1020 = vmatprep.mubr.bf16.mxu0 0
    %1021 = vmatmul.mubr.bf16.gmra.mrb[0].mxu0 %v980
    %v1022 = vpop.f32.mrb[0].mxu0
    %v1023 = vadd.f32 0.0, %v1022
    %v1024 = vpop.f32.mrb[0].mxu0
    %v1025 = vpop.f32.mrb[0].mxu0
    %v1026 = vadd.f32 0.0, %v1025
    %v1027 = vpop.f32.mrb[0].mxu0
    %1028 = vmatprep.mubr.bf16.mxu0 0
    %1029 = vmatmul.mubr.bf16.gmra.mrb[0].mxu0 %v981
    %v1030 = vpop.f32.mrb[0].mxu0
    %v1031 = vadd.f32 0.0, %v1030
    %v1032 = vpop.f32.mrb[0].mxu0
    %v1033 = vpop.f32.mrb[0].mxu0
    %v1034 = vadd.f32 0.0, %v1033
    %v1035 = vpop.f32.mrb[0].mxu0
    %1036 = vmatprep.mubr.bf16.mxu0 0
    %1037 = vmatmul.mubr.bf16.gmra.mrb[0].mxu0 %v982
    %v1038 = vpop.f32.mrb[0].mxu0
    %v1039 = vadd.f32 0.0, %v1038
    %v1040 = vpop.f32.mrb[0].mxu0
    %v1041 = vpop.f32.mrb[0].mxu0
    %v1042 = vadd.f32 0.0, %v1041
    %v1043 = vpop.f32.mrb[0].mxu0
    %1044 = vmatprep.mubr.bf16.mxu0 0
    %1045 = vmatmul.mubr.bf16.gmra.mrb[0].mxu0 %v983
    %v1046 = vpop.f32.mrb[0].mxu0
    %v1047 = vadd.f32 0.0, %v1046
    %v1048 = vpop.f32.mrb[0].mxu0
    %v1049 = vpop.f32.mrb[0].mxu0
    %v1050 = vadd.f32 0.0, %v1049
    %v1051 = vpop.f32.mrb[0].mxu0
    %1052 = vmatprep.mubr.bf16.mxu0 0
    %1053 = vmatmul.mubr.bf16.gmra.mrb[0].mxu0 %v984
    %v1054 = vpop.f32.mrb[0].mxu0
    %v1055 = vadd.f32 0.0, %v1054
    %v1056 = vpop.f32.mrb[0].mxu0
    %v1057 = vpop.f32.mrb[0].mxu0
    %v1058 = vadd.f32 0.0, %v1057
    %v1059 = vpop.f32.mrb[0].mxu0
    %1060 = vmatprep.mubr.bf16.mxu0 0
    %1061 = vmatmul.mubr.bf16.gmra.mrb[0].mxu0 %v985
    %v1062 = vpop.f32.mrb[0].mxu0
    %v1063 = vadd.f32 0.0, %v1062
    %v1064 = vpop.f32.mrb[0].mxu0
    %v1065 = vpop.f32.mrb[0].mxu0
    %v1066 = vadd.f32 0.0, %v1065
    %v1067 = vpop.f32.mrb[0].mxu0
    %1068 = vmatprep.mubr.bf16.mxu0 0
    %1069 = vmatmul.mubr.bf16.gmra.mrb[0].mxu0 %v986
    %v1070 = vpop.f32.mrb[0].mxu0
    %v1071 = vadd.f32 0.0, %v1070
    %v1072 = vpop.f32.mrb[0].mxu0
    %v1073 = vpop.f32.mrb[0].mxu0
    %v1074 = vadd.f32 0.0, %v1073
    %v1075 = vpop.f32.mrb[0].mxu0
    %1076 = vmatprep.mubr.bf16.mxu0 0
    %1077 = vmatmul.mubr.bf16.gmra.mrb[0].mxu0 %v987
    %v1078 = vpop.f32.mrb[0].mxu0
    %v1079 = vadd.f32 0.0, %v1078
    %v1080 = vpop.f32.mrb[0].mxu0
    %v1081 = vpop.f32.mrb[0].mxu0
    %v1082 = vadd.f32 0.0, %v1081
    %v1083 = vpop.f32.mrb[0].mxu0
    %1084 = vdwg.mxu0
    %v1085 = vrcp.pop %v949
    %v1086 = vrcp.pop %v951
    %v1087 = vrcp.pop %v953
    %v1088 = vrcp.pop %v955
    %v1089 = vrcp.pop %v957
    %v1090 = vrcp.pop %v959
    %v1091 = vrcp.pop %v961
    %v1092 = vrcp.pop %v963
    %v1093 = vrcp.pop %v965
    %v1094 = vrcp.pop %v967
    %v1095 = vrcp.pop %v969
    %v1096 = vrcp.pop %v971
    %v1097 = vrcp.pop %v973
    %v1098 = vrcp.pop %v975
    %v1099 = vrcp.pop %v977
    %v1100 = vrcp.pop %v979
    %v1101 = vmul.f32 %v1023, %v1085
    %v1102 = vmul.f32 %v1026, %v1086
    %v1103 = vmul.f32 %v1031, %v1087
    %v1104 = vmul.f32 %v1034, %v1088
    %v1105 = vmul.f32 %v1039, %v1089
    %v1106 = vmul.f32 %v1042, %v1090
    %v1107 = vmul.f32 %v1047, %v1091
    %v1108 = vmul.f32 %v1050, %v1092
    %v1109 = vmul.f32 %v1055, %v1093
    %v1110 = vmul.f32 %v1058, %v1094
    %v1111 = vmul.f32 %v1063, %v1095
    %v1112 = vmul.f32 %v1066, %v1096
    %v1113 = vmul.f32 %v1071, %v1097
    %v1114 = vmul.f32 %v1074, %v1098
    %v1115 = vmul.f32 %v1079, %v1099
    %v1116 = vmul.f32 %v1082, %v1100
    %v1117 = vmax.f32 %v1101, 0.0
    %v1118 = vmax.f32 %v1102, 0.0
    %v1119 = vmax.f32 %v1103, 0.0
    %v1120 = vmax.f32 %v1104, 0.0
    %v1121 = vmax.f32 %v1105, 0.0
    %v1122 = vmax.f32 %v1106, 0.0
    %v1123 = vmax.f32 %v1107, 0.0
    %v1124 = vmax.f32 %v1108, 0.0
    %v1125 = vmax.f32 %v1109, 0.0
    %v1126 = vmax.f32 %v1110, 0.0
    %v1127 = vmax.f32 %v1111, 0.0
    %v1128 = vmax.f32 %v1112, 0.0
    %v1129 = vmax.f32 %v1113, 0.0
    %v1130 = vmax.f32 %v1114, 0.0
    %v1131 = vmax.f32 %v1115, 0.0
    %v1132 = vmax.f32 %v1116, 0.0
    %v1133 = vpack.c.bf16 %v1118, %v1117
    %v1134 = vpack.c.bf16 %v1120, %v1119
    %v1135 = vpack.c.bf16 %v1122, %v1121
    %v1136 = vpack.c.bf16 %v1124, %v1123
    %v1137 = vpack.c.bf16 %v1126, %v1125
    %v1138 = vpack.c.bf16 %v1128, %v1127
    %v1139 = vpack.c.bf16 %v1130, %v1129
    %v1140 = vpack.c.bf16 %v1132, %v1131
    %s1141 = sld [smem:[#allocation2 + $0x1]]
    %s1142 = scalar_lea.vmem %s4, 64
    %v1143 = vld [vmem:[%s1142] sm:$0xf]
    %v1144 = vld [vmem:[%s1142 + $0x4] sm:$0xf]
    %v1145 = vld [vmem:[%s1142 + $0x8] sm:$0xf]
    %v1146 = vld [vmem:[%s1142 + $0xc] sm:$0xf]
    %v1147 = vld [vmem:[%s1142 + $0x10] sm:$0xf]
    %v1148 = vld [vmem:[%s1142 + $0x14] sm:$0xf]
    %v1149 = vld [vmem:[%s1142 + $0x18] sm:$0xf]
    %v1150 = vld [vmem:[%s1142 + $0x1c] sm:$0xf]
    %v1151 = vld [vmem:[%s1142 + $0x20] sm:$0xf]
    %v1152 = vld [vmem:[%s1142 + $0x24] sm:$0xf]
    %v1153 = vld [vmem:[%s1142 + $0x28] sm:$0xf]
    %v1154 = vld [vmem:[%s1142 + $0x2c] sm:$0xf]
    %v1155 = vld [vmem:[%s1142 + $0x30] sm:$0xf]
    %v1156 = vld [vmem:[%s1142 + $0x34] sm:$0xf]
    %v1157 = vld [vmem:[%s1142 + $0x38] sm:$0xf]
    %v1158 = vld [vmem:[%s1142 + $0x3c] sm:$0xf]
    %v1175 = vunpack.c.l.b16 %v1143
    %v1176 = vunpack.c.l.b16 %v1144
    %v1177 = vunpack.c.l.b16 %v1145
    %v1178 = vunpack.c.l.b16 %v1146
    %v1179 = vunpack.c.l.b16 %v1147
    %v1180 = vunpack.c.l.b16 %v1148
    %v1181 = vunpack.c.l.b16 %v1149
    %v1182 = vunpack.c.l.b16 %v1150
    %v1183 = vunpack.c.l.b16 %v1151
    %v1184 = vunpack.c.l.b16 %v1152
    %v1185 = vunpack.c.l.b16 %v1153
    %v1186 = vunpack.c.l.b16 %v1154
    %v1187 = vunpack.c.l.b16 %v1155
    %v1188 = vunpack.c.l.b16 %v1156
    %v1189 = vunpack.c.l.b16 %v1157
    %v1190 = vunpack.c.l.b16 %v1158
    %v1191 = vpack.c.b16 %v1176, %v1175
    %v1192 = vpack.c.b16 %v1178, %v1177
    %v1193 = vpack.c.b16 %v1180, %v1179
    %v1194 = vpack.c.b16 %v1182, %v1181
    %v1195 = vpack.c.b16 %v1184, %v1183
    %v1196 = vpack.c.b16 %v1186, %v1185
    %v1197 = vpack.c.b16 %v1188, %v1187
    %v1198 = vpack.c.b16 %v1190, %v1189
    %1207 = vmatprep.subr.bf16.mxu0 0
    %1208 = vmatpush1.bf16.msra.mxu0 %v1191
    %1209 = vmatprep.subr.bf16.mxu0 0
    %1210 = vmatpush1.bf16.msra.mxu0 %v1192
    %1211 = vmatprep.subr.bf16.mxu0 0
    %1212 = vmatpush1.bf16.msra.mxu0 %v1193
    %1213 = vmatprep.subr.bf16.mxu0 0
    %1214 = vmatpush1.bf16.msra.mxu0 %v1194
    %1215 = vmatprep.subr.bf16.mxu0 0
    %1216 = vmatpush1.bf16.msra.mxu0 %v1195
    %1217 = vmatprep.subr.bf16.mxu0 0
    %1218 = vmatpush1.bf16.msra.mxu0 %v1196
    %1219 = vmatprep.subr.bf16.mxu0 0
    %1220 = vmatpush1.bf16.msra.mxu0 %v1197
    %1221 = vmatprep.subr.bf16.mxu0 0
    %1222 = vmatpush1.bf16.msra.mxu0 %v1198
    %1223 = vmatprep.subr.bf16.mxu0 0
    %1224 = vmatpush1.bf16.msra.mxu0 0
    %1225 = vmatprep.subr.bf16.mxu0 0
    %1226 = vmatpush1.bf16.msra.mxu0 0
    %1227 = vmatprep.subr.bf16.mxu0 0
    %1228 = vmatpush1.bf16.msra.mxu0 0
    %1229 = vmatprep.subr.bf16.mxu0 0
    %1230 = vmatpush1.bf16.msra.mxu0 0
    %1231 = vmatprep.subr.bf16.mxu0 0
    %1232 = vmatpush1.bf16.msra.mxu0 0
    %1233 = vmatprep.subr.bf16.mxu0 0
    %1234 = vmatpush1.bf16.msra.mxu0 0
    %1235 = vmatprep.subr.bf16.mxu0 0
    %1236 = vmatpush1.bf16.msra.mxu0 0
    %1237 = vmatprep.subr.bf16.mxu0 0
    %1238 = vmatpush1.bf16.msra.mxu0 0
    %1239 = vmatprep.mubr.bf16.mxu0 0
    %1240 = vmatmul.mubr.bf16.gmra.mrb[0].mxu0 %v1133
    %v1241 = vpop.f32.mrb[0].mxu0
    %v1242 = vadd.f32 0.0, %v1241
    %v1243 = vpop.f32.mrb[0].mxu0
    %v1244 = vpop.f32.mrb[0].mxu0
    %v1245 = vadd.f32 0.0, %v1244
    %v1246 = vpop.f32.mrb[0].mxu0
    %1247 = vmatprep.mubr.bf16.mxu0 0
    %1248 = vmatmul.mubr.bf16.gmra.mrb[0].mxu0 %v1134
    %v1249 = vpop.f32.mrb[0].mxu0
    %v1250 = vadd.f32 0.0, %v1249
    %v1251 = vpop.f32.mrb[0].mxu0
    %v1252 = vpop.f32.mrb[0].mxu0
    %v1253 = vadd.f32 0.0, %v1252
    %v1254 = vpop.f32.mrb[0].mxu0
    %1255 = vmatprep.mubr.bf16.mxu0 0
    %1256 = vmatmul.mubr.bf16.gmra.mrb[0].mxu0 %v1135
    %v1257 = vpop.f32.mrb[0].mxu0
    %v1258 = vadd.f32 0.0, %v1257
    %v1259 = vpop.f32.mrb[0].mxu0
    %v1260 = vpop.f32.mrb[0].mxu0
    %v1261 = vadd.f32 0.0, %v1260
    %v1262 = vpop.f32.mrb[0].mxu0
    %1263 = vmatprep.mubr.bf16.mxu0 0
    %1264 = vmatmul.mubr.bf16.gmra.mrb[0].mxu0 %v1136
    %v1265 = vpop.f32.mrb[0].mxu0
    %v1266 = vadd.f32 0.0, %v1265
    %v1267 = vpop.f32.mrb[0].mxu0
    %v1268 = vpop.f32.mrb[0].mxu0
    %v1269 = vadd.f32 0.0, %v1268
    %v1270 = vpop.f32.mrb[0].mxu0
    %1271 = vmatprep.mubr.bf16.mxu0 0
    %1272 = vmatmul.mubr.bf16.gmra.mrb[0].mxu0 %v1137
    %v1273 = vpop.f32.mrb[0].mxu0
    %v1274 = vadd.f32 0.0, %v1273
    %v1275 = vpop.f32.mrb[0].mxu0
    %v1276 = vpop.f32.mrb[0].mxu0
    %v1277 = vadd.f32 0.0, %v1276
    %v1278 = vpop.f32.mrb[0].mxu0
    %1279 = vmatprep.mubr.bf16.mxu0 0
    %1280 = vmatmul.mubr.bf16.gmra.mrb[0].mxu0 %v1138
    %v1281 = vpop.f32.mrb[0].mxu0
    %v1282 = vadd.f32 0.0, %v1281
    %v1283 = vpop.f32.mrb[0].mxu0
    %v1284 = vpop.f32.mrb[0].mxu0
    %v1285 = vadd.f32 0.0, %v1284
    %v1286 = vpop.f32.mrb[0].mxu0
    %1287 = vmatprep.mubr.bf16.mxu0 0
    %1288 = vmatmul.mubr.bf16.gmra.mrb[0].mxu0 %v1139
    %v1289 = vpop.f32.mrb[0].mxu0
    %v1290 = vadd.f32 0.0, %v1289
    %v1291 = vpop.f32.mrb[0].mxu0
    %v1292 = vpop.f32.mrb[0].mxu0
    %v1293 = vadd.f32 0.0, %v1292
    %v1294 = vpop.f32.mrb[0].mxu0
    %1295 = vmatprep.mubr.bf16.mxu0 0
    %1296 = vmatmul.mubr.bf16.gmra.mrb[0].mxu0 %v1140
    %v1297 = vpop.f32.mrb[0].mxu0
    %v1298 = vadd.f32 0.0, %v1297
    %v1299 = vpop.f32.mrb[0].mxu0
    %v1300 = vpop.f32.mrb[0].mxu0
    %v1301 = vadd.f32 0.0, %v1300
    %v1302 = vpop.f32.mrb[0].mxu0
    %1303 = vdwg.mxu0
    %v1304 = vpack.c.bf16 %v1245, %v1242
    %v1305 = vpack.c.bf16 %v1253, %v1250
    %v1306 = vpack.c.bf16 %v1261, %v1258
    %v1307 = vpack.c.bf16 %v1269, %v1266
    %v1308 = vpack.c.bf16 %v1277, %v1274
    %v1309 = vpack.c.bf16 %v1285, %v1282
    %v1310 = vpack.c.bf16 %v1293, %v1290
    %v1311 = vpack.c.bf16 %v1301, %v1298
    %1312 = vmatprep.subr.bf16.mxu0 0
    %1313 = vmatpush1.bf16.xpose.msra.mxu0 %v1304
    %1314 = vmatprep.subr.bf16.mxu0 0
    %1315 = vmatpush1.bf16.xpose.msra.mxu0 %v1305
    %1316 = vmatprep.subr.bf16.mxu0 0
    %1317 = vmatpush1.bf16.xpose.msra.mxu0 %v1306
    %1318 = vmatprep.subr.bf16.mxu0 0
    %1319 = vmatpush1.bf16.xpose.msra.mxu0 %v1307
    %1320 = vmatprep.subr.bf16.mxu0 0
    %1321 = vmatpush1.bf16.xpose.msra.mxu0 %v1308
    %1322 = vmatprep.subr.bf16.mxu0 0
    %1323 = vmatpush1.bf16.xpose.msra.mxu0 %v1309
    %1324 = vmatprep.subr.bf16.mxu0 0
    %1325 = vmatpush1.bf16.xpose.msra.mxu0 %v1310
    %1326 = vmatprep.subr.bf16.mxu0 0
    %1327 = vmatpush1.bf16.xpose.msra.mxu0 %v1311
    %1328 = vmatprep.subr.bf16.mxu0 0
    %1329 = vmatpush1.bf16.xpose.msra.mxu0 0
    %1330 = vmatprep.subr.bf16.mxu0 0
    %1331 = vmatpush1.bf16.xpose.msra.mxu0 0
    %1332 = vmatprep.subr.bf16.mxu0 0
    %1333 = vmatpush1.bf16.xpose.msra.mxu0 0
    %1334 = vmatprep.subr.bf16.mxu0 0
    %1335 = vmatpush1.bf16.xpose.msra.mxu0 0
    %1336 = vmatprep.subr.bf16.mxu0 0
    %1337 = vmatpush1.bf16.xpose.msra.mxu0 0
    %1338 = vmatprep.subr.bf16.mxu0 0
    %1339 = vmatpush1.bf16.xpose.msra.mxu0 0
    %1340 = vmatprep.subr.bf16.mxu0 0
    %1341 = vmatpush1.bf16.xpose.msra.mxu0 0
    %1342 = vmatprep.subr.bf16.mxu0 0
    %1343 = vmatpush1.bf16.xpose.msra.mxu0 0
    %1344 = vmatprep.mubr.bf16.mxu0 0
    %1345 = vmatmul.mubr.bf16.gmra.mrb[0].mxu0 %v1304
    %v1346 = vpop.f32.mrb[0].mxu0
    %v1347 = vadd.f32 0.0, %v1346
    %v1348 = vpop.f32.mrb[0].mxu0
    %v1349 = vpop.f32.mrb[0].mxu0
    %v1350 = vadd.f32 0.0, %v1349
    %v1351 = vpop.f32.mrb[0].mxu0
    %1352 = vmatprep.mubr.bf16.mxu0 0
    %1353 = vmatmul.mubr.bf16.gmra.mrb[0].mxu0 %v1305
    %v1354 = vpop.f32.mrb[0].mxu0
    %v1355 = vadd.f32 0.0, %v1354
    %v1356 = vpop.f32.mrb[0].mxu0
    %v1357 = vpop.f32.mrb[0].mxu0
    %v1358 = vadd.f32 0.0, %v1357
    %v1359 = vpop.f32.mrb[0].mxu0
    %1360 = vmatprep.mubr.bf16.mxu0 0
    %1361 = vmatmul.mubr.bf16.gmra.mrb[0].mxu0 %v1306
    %v1362 = vpop.f32.mrb[0].mxu0
    %v1363 = vadd.f32 0.0, %v1362
    %v1364 = vpop.f32.mrb[0].mxu0
    %v1365 = vpop.f32.mrb[0].mxu0
    %v1366 = vadd.f32 0.0, %v1365
    %v1367 = vpop.f32.mrb[0].mxu0
    %1368 = vmatprep.mubr.bf16.mxu0 0
    %1369 = vmatmul.mubr.bf16.gmra.mrb[0].mxu0 %v1307
    %v1370 = vpop.f32.mrb[0].mxu0
    %v1371 = vadd.f32 0.0, %v1370
    %v1372 = vpop.f32.mrb[0].mxu0
    %v1373 = vpop.f32.mrb[0].mxu0
    %v1374 = vadd.f32 0.0, %v1373
    %v1375 = vpop.f32.mrb[0].mxu0
    %1376 = vmatprep.mubr.bf16.mxu0 0
    %1377 = vmatmul.mubr.bf16.gmra.mrb[0].mxu0 %v1308
    %v1378 = vpop.f32.mrb[0].mxu0
    %v1379 = vadd.f32 0.0, %v1378
    %v1380 = vpop.f32.mrb[0].mxu0
    %v1381 = vpop.f32.mrb[0].mxu0
    %v1382 = vadd.f32 0.0, %v1381
    %v1383 = vpop.f32.mrb[0].mxu0
    %1384 = vmatprep.mubr.bf16.mxu0 0
    %1385 = vmatmul.mubr.bf16.gmra.mrb[0].mxu0 %v1309
    %v1386 = vpop.f32.mrb[0].mxu0
    %v1387 = vadd.f32 0.0, %v1386
    %v1388 = vpop.f32.mrb[0].mxu0
    %v1389 = vpop.f32.mrb[0].mxu0
    %v1390 = vadd.f32 0.0, %v1389
    %v1391 = vpop.f32.mrb[0].mxu0
    %1392 = vmatprep.mubr.bf16.mxu0 0
    %1393 = vmatmul.mubr.bf16.gmra.mrb[0].mxu0 %v1310
    %v1394 = vpop.f32.mrb[0].mxu0
    %v1395 = vadd.f32 0.0, %v1394
    %v1396 = vpop.f32.mrb[0].mxu0
    %v1397 = vpop.f32.mrb[0].mxu0
    %v1398 = vadd.f32 0.0, %v1397
    %v1399 = vpop.f32.mrb[0].mxu0
    %1400 = vmatprep.mubr.bf16.mxu0 0
    %1401 = vmatmul.mubr.bf16.gmra.mrb[0].mxu0 %v1311
    %v1402 = vpop.f32.mrb[0].mxu0
    %v1403 = vadd.f32 0.0, %v1402
    %v1404 = vpop.f32.mrb[0].mxu0
    %v1405 = vpop.f32.mrb[0].mxu0
    %v1406 = vadd.f32 0.0, %v1405
    %v1407 = vpop.f32.mrb[0].mxu0
    %1408 = vdwg.mxu0
    %v1409 = vmul.f32 %v1242, %v1242
    %v1410 = vmul.f32 %v1245, %v1245
    %v1411 = vmul.f32 %v1250, %v1250
    %v1412 = vmul.f32 %v1253, %v1253
    %v1413 = vmul.f32 %v1258, %v1258
    %v1414 = vmul.f32 %v1261, %v1261
    %v1415 = vmul.f32 %v1266, %v1266
    %v1416 = vmul.f32 %v1269, %v1269
    %v1417 = vmul.f32 %v1274, %v1274
    %v1418 = vmul.f32 %v1277, %v1277
    %v1419 = vmul.f32 %v1282, %v1282
    %v1420 = vmul.f32 %v1285, %v1285
    %v1421 = vmul.f32 %v1290, %v1290
    %v1422 = vmul.f32 %v1293, %v1293
    %v1423 = vmul.f32 %v1298, %v1298
    %v1424 = vmul.f32 %v1301, %v1301
    %1425 = vadd.xlane.f32.xlu0 %v1409
    %v1426 = vpop.xlane.xlu0 %1425
    %1427 = vadd.xlane.f32.xlu0 %v1410
    %v1428 = vpop.xlane.xlu0 %1427
    %1429 = vadd.xlane.f32.xlu0 %v1411
    %v1430 = vpop.xlane.xlu0 %1429
    %1431 = vadd.xlane.f32.xlu0 %v1412
    %v1432 = vpop.xlane.xlu0 %1431
    %1433 = vadd.xlane.f32.xlu0 %v1413
    %v1434 = vpop.xlane.xlu0 %1433
    %1435 = vadd.xlane.f32.xlu0 %v1414
    %v1436 = vpop.xlane.xlu0 %1435
    %1437 = vadd.xlane.f32.xlu0 %v1415
    %v1438 = vpop.xlane.xlu0 %1437
    %1439 = vadd.xlane.f32.xlu0 %v1416
    %v1440 = vpop.xlane.xlu0 %1439
    %1441 = vadd.xlane.f32.xlu0 %v1417
    %v1442 = vpop.xlane.xlu0 %1441
    %1443 = vadd.xlane.f32.xlu0 %v1418
    %v1444 = vpop.xlane.xlu0 %1443
    %1445 = vadd.xlane.f32.xlu0 %v1419
    %v1446 = vpop.xlane.xlu0 %1445
    %1447 = vadd.xlane.f32.xlu0 %v1420
    %v1448 = vpop.xlane.xlu0 %1447
    %1449 = vadd.xlane.f32.xlu0 %v1421
    %v1450 = vpop.xlane.xlu0 %1449
    %1451 = vadd.xlane.f32.xlu0 %v1422
    %v1452 = vpop.xlane.xlu0 %1451
    %1453 = vadd.xlane.f32.xlu0 %v1423
    %v1454 = vpop.xlane.xlu0 %1453
    %1455 = vadd.xlane.f32.xlu0 %v1424
    %v1456 = vpop.xlane.xlu0 %1455
    %v1457 = vadd.f32 %v1426, 1e-12
    %v1458 = vadd.f32 %v1428, 1e-12
    %v1459 = vadd.f32 %v1430, 1e-12
    %v1460 = vadd.f32 %v1432, 1e-12
    %v1461 = vadd.f32 %v1434, 1e-12
    %v1462 = vadd.f32 %v1436, 1e-12
    %v1463 = vadd.f32 %v1438, 1e-12
    %v1464 = vadd.f32 %v1440, 1e-12
    %v1465 = vadd.f32 %v1442, 1e-12
    %v1466 = vadd.f32 %v1444, 1e-12
    %v1467 = vadd.f32 %v1446, 1e-12
    %v1468 = vadd.f32 %v1448, 1e-12
    %v1469 = vadd.f32 %v1450, 1e-12
    %v1470 = vadd.f32 %v1452, 1e-12
    %v1471 = vadd.f32 %v1454, 1e-12
    %v1472 = vadd.f32 %v1456, 1e-12
    %v1473 = vrsqrt.pop %v1457
    %v1474 = vrsqrt.pop %v1458
    %v1475 = vrsqrt.pop %v1459
    %v1476 = vrsqrt.pop %v1460
    %v1477 = vrsqrt.pop %v1461
    %v1478 = vrsqrt.pop %v1462
    %v1479 = vrsqrt.pop %v1463
    %v1480 = vrsqrt.pop %v1464
    %v1481 = vrsqrt.pop %v1465
    %v1482 = vrsqrt.pop %v1466
    %v1483 = vrsqrt.pop %v1467
    %v1484 = vrsqrt.pop %v1468
    %v1485 = vrsqrt.pop %v1469
    %v1486 = vrsqrt.pop %v1470
    %v1487 = vrsqrt.pop %v1471
    %v1488 = vrsqrt.pop %v1472
    %1489 = vmatprep.subr.mxu0 0.0
    %1490 = vmatpush1.xpose.msra.mxu0 %v1409
    %1491 = vmatprep.subr.mxu0 0.0
    %1492 = vmatpush1.xpose.msra.mxu0 %v1410
    %1493 = vmatprep.subr.mxu0 0.0
    %1494 = vmatpush1.xpose.msra.mxu0 %v1411
    %1495 = vmatprep.subr.mxu0 0.0
    %1496 = vmatpush1.xpose.msra.mxu0 %v1412
    %1497 = vmatprep.subr.mxu0 0.0
    %1498 = vmatpush1.xpose.msra.mxu0 %v1413
    %1499 = vmatprep.subr.mxu0 0.0
    %1500 = vmatpush1.xpose.msra.mxu0 %v1414
    %1501 = vmatprep.subr.mxu0 0.0
    %1502 = vmatpush1.xpose.msra.mxu0 %v1415
    %1503 = vmatprep.subr.mxu0 0.0
    %1504 = vmatpush1.xpose.msra.mxu0 %v1416
    %1505 = vmatprep.subr.mxu0 0.0
    %1506 = vmatpush1.xpose.msra.mxu0 %v1417
    %1507 = vmatprep.subr.mxu0 0.0
    %1508 = vmatpush1.xpose.msra.mxu0 %v1418
    %1509 = vmatprep.subr.mxu0 0.0
    %1510 = vmatpush1.xpose.msra.mxu0 %v1419
    %1511 = vmatprep.subr.mxu0 0.0
    %1512 = vmatpush1.xpose.msra.mxu0 %v1420
    %1513 = vmatprep.subr.mxu0 0.0
    %1514 = vmatpush1.xpose.msra.mxu0 %v1421
    %1515 = vmatprep.subr.mxu0 0.0
    %1516 = vmatpush1.xpose.msra.mxu0 %v1422
    %1517 = vmatprep.subr.mxu0 0.0
    %1518 = vmatpush1.xpose.msra.mxu0 %v1423
    %1519 = vmatprep.subr.mxu0 0.0
    %1520 = vmatpush1.xpose.msra.mxu0 %v1424
    %1521 = vmatprep.subr.mxu0 0.0
    %1522 = vmatpush1.xpose.msra.mxu0 0.0
    %1523 = vmatprep.subr.mxu0 0.0
    %1524 = vmatpush1.xpose.msra.mxu0 0.0
    %1525 = vmatprep.subr.mxu0 0.0
    %1526 = vmatpush1.xpose.msra.mxu0 0.0
    %1527 = vmatprep.subr.mxu0 0.0
    %1528 = vmatpush1.xpose.msra.mxu0 0.0
    %1529 = vmatprep.subr.mxu0 0.0
    %1530 = vmatpush1.xpose.msra.mxu0 0.0
    %1531 = vmatprep.subr.mxu0 0.0
    %1532 = vmatpush1.xpose.msra.mxu0 0.0
    %1533 = vmatprep.subr.mxu0 0.0
    %1534 = vmatpush1.xpose.msra.mxu0 0.0
    %1535 = vmatprep.subr.mxu0 0.0
    %1536 = vmatpush1.xpose.msra.mxu0 0.0
    %1537 = vmatprep.subr.mxu0 0.0
    %1538 = vmatpush1.xpose.msra.mxu0 0.0
    %1539 = vmatprep.subr.mxu0 0.0
    %1540 = vmatpush1.xpose.msra.mxu0 0.0
    %1541 = vmatprep.subr.mxu0 0.0
    %1542 = vmatpush1.xpose.msra.mxu0 0.0
    %1543 = vmatprep.subr.mxu0 0.0
    %1544 = vmatpush1.xpose.msra.mxu0 0.0
    %1545 = vmatprep.subr.mxu0 0.0
    %1546 = vmatpush1.xpose.msra.mxu0 0.0
    %1547 = vmatprep.subr.mxu0 0.0
    %1548 = vmatpush1.xpose.msra.mxu0 0.0
    %1549 = vmatprep.subr.mxu0 0.0
    %1550 = vmatpush1.xpose.msra.mxu0 0.0
    %1551 = vmatprep.subr.mxu0 0.0
    %1552 = vmatpush1.xpose.msra.mxu0 0.0
    %1553 = vmatprep.mubr.f32.mxu0 0.0
    %1554 = vmatmul.mubr.f32.gmra.mrb[0].mxu0 1.0
    %v1555 = vpop.f32.mrb[0].mxu0
    %v1556 = vadd.f32 1e-12, %v1555
    %v1557 = vpop.f32.mrb[0].mxu0
    %1558 = vdwg.mxu0
    %v1559 = vrsqrt.pop %v1556
    %v1560 = vstv %s1141
    %v1561 = vmul.f32 %v1560, %v1473
    %v1562 = vmul.f32 %v1560, %v1474
    %v1563 = vmul.f32 %v1560, %v1475
    %v1564 = vmul.f32 %v1560, %v1476
    %v1565 = vmul.f32 %v1560, %v1477
    %v1566 = vmul.f32 %v1560, %v1478
    %v1567 = vmul.f32 %v1560, %v1479
    %v1568 = vmul.f32 %v1560, %v1480
    %v1569 = vmul.f32 %v1560, %v1481
    %v1570 = vmul.f32 %v1560, %v1482
    %v1571 = vmul.f32 %v1560, %v1483
    %v1572 = vmul.f32 %v1560, %v1484
    %v1573 = vmul.f32 %v1560, %v1485
    %v1574 = vmul.f32 %v1560, %v1486
    %v1575 = vmul.f32 %v1560, %v1487
    %v1576 = vmul.f32 %v1560, %v1488
    %v1577 = vmul.f32 %v1347, %v1561
    %v1578 = vmul.f32 %v1350, %v1562
    %v1579 = vmul.f32 %v1355, %v1563
    %v1580 = vmul.f32 %v1358, %v1564
    %v1581 = vmul.f32 %v1363, %v1565
    %v1582 = vmul.f32 %v1366, %v1566
    %v1583 = vmul.f32 %v1371, %v1567
    %v1584 = vmul.f32 %v1374, %v1568
    %v1585 = vmul.f32 %v1379, %v1569
    %v1586 = vmul.f32 %v1382, %v1570
    %v1587 = vmul.f32 %v1387, %v1571
    %v1588 = vmul.f32 %v1390, %v1572
    %v1589 = vmul.f32 %v1395, %v1573
    %v1590 = vmul.f32 %v1398, %v1574
    %v1591 = vmul.f32 %v1403, %v1575
    %v1592 = vmul.f32 %v1406, %v1576
    %v1593 = vlaneseq
    %v1594 = vshrl.u32 %v1593, 7
    %v1595 = vsub.s32 0, %v1594
    %v1596 = vrot.slane %v1559, %v1595
    %v1597 = vmul.f32 %v1577, %v1596
    %v1598 = vmul.f32 %v1578, %v1596
    %v1599 = vmul.f32 %v1579, %v1596
    %v1600 = vmul.f32 %v1580, %v1596
    %v1601 = vmul.f32 %v1581, %v1596
    %v1602 = vmul.f32 %v1582, %v1596
    %v1603 = vmul.f32 %v1583, %v1596
    %v1604 = vmul.f32 %v1584, %v1596
    %v1605 = vmul.f32 %v1585, %v1596
    %v1606 = vmul.f32 %v1586, %v1596
    %v1607 = vmul.f32 %v1587, %v1596
    %v1608 = vmul.f32 %v1588, %v1596
    %v1609 = vmul.f32 %v1589, %v1596
    %v1610 = vmul.f32 %v1590, %v1596
    %v1611 = vmul.f32 %v1591, %v1596
    %v1612 = vmul.f32 %v1592, %v1596
    %s1613 = sand.u32 2147483647, %s1141
    %s1614 = smin.f32 %s1613, 30.0
    %v1615 = vstv %s1614
    %v1616 = vsub.f32 %v1597, %v1615
    %v1617 = vsub.f32 %v1598, %v1615
    %v1618 = vsub.f32 %v1599, %v1615
    %v1619 = vsub.f32 %v1600, %v1615
    %v1620 = vsub.f32 %v1601, %v1615
    %v1621 = vsub.f32 %v1602, %v1615
    %v1622 = vsub.f32 %v1603, %v1615
    %v1623 = vsub.f32 %v1604, %v1615
    %v1624 = vsub.f32 %v1605, %v1615
    %v1625 = vsub.f32 %v1606, %v1615
    %v1626 = vsub.f32 %v1607, %v1615
    %v1627 = vsub.f32 %v1608, %v1615
    %v1628 = vsub.f32 %v1609, %v1615
    %v1629 = vsub.f32 %v1610, %v1615
    %v1630 = vsub.f32 %v1611, %v1615
    %v1631 = vsub.f32 %v1612, %v1615
    %v1632 = vmul.f32 %v1616, 1.442695
    %v1633 = vpow.pop %v1632
    %v1634 = vmul.f32 %v1617, 1.442695
    %v1635 = vpow.pop %v1634
    %v1636 = vmul.f32 %v1618, 1.442695
    %v1637 = vpow.pop %v1636
    %v1638 = vmul.f32 %v1619, 1.442695
    %v1639 = vpow.pop %v1638
    %v1640 = vmul.f32 %v1620, 1.442695
    %v1641 = vpow.pop %v1640
    %v1642 = vmul.f32 %v1621, 1.442695
    %v1643 = vpow.pop %v1642
    %v1644 = vmul.f32 %v1622, 1.442695
    %v1645 = vpow.pop %v1644
    %v1646 = vmul.f32 %v1623, 1.442695
    %v1647 = vpow.pop %v1646
    %v1648 = vmul.f32 %v1624, 1.442695
    %v1649 = vpow.pop %v1648
    %v1650 = vmul.f32 %v1625, 1.442695
    %v1651 = vpow.pop %v1650
    %v1652 = vmul.f32 %v1626, 1.442695
    %v1653 = vpow.pop %v1652
    %v1654 = vmul.f32 %v1627, 1.442695
    %v1655 = vpow.pop %v1654
    %v1656 = vmul.f32 %v1628, 1.442695
    %v1657 = vpow.pop %v1656
    %v1658 = vmul.f32 %v1629, 1.442695
    %v1659 = vpow.pop %v1658
    %v1660 = vmul.f32 %v1630, 1.442695
    %v1661 = vpow.pop %v1660
    %v1662 = vmul.f32 %v1631, 1.442695
    %v1663 = vpow.pop %v1662
    %v1664 = vsel %vm916, %v1633, 0.0
    %v1665 = vsel %vm917, %v1635, 0.0
    %v1666 = vsel %vm918, %v1637, 0.0
    %v1667 = vsel %vm919, %v1639, 0.0
    %v1668 = vsel %vm920, %v1641, 0.0
    %v1669 = vsel %vm921, %v1643, 0.0
    %v1670 = vsel %vm922, %v1645, 0.0
    %v1671 = vsel %vm923, %v1647, 0.0
    %v1672 = vsel %vm924, %v1649, 0.0
    %v1673 = vsel %vm925, %v1651, 0.0
    %v1674 = vsel %vm926, %v1653, 0.0
    %v1675 = vsel %vm927, %v1655, 0.0
    %v1676 = vsel %vm928, %v1657, 0.0
    %v1677 = vsel %vm929, %v1659, 0.0
    %v1678 = vsel %vm930, %v1661, 0.0
    %v1679 = vsel %vm931, %v1663, 0.0
    %1680 = vadd.xlane.f32.xlu0 %v1664
    %v1681 = vpop.xlane.xlu0 %1680
    %1682 = vadd.xlane.f32.xlu0 %v1665
    %v1683 = vpop.xlane.xlu0 %1682
    %1684 = vadd.xlane.f32.xlu0 %v1666
    %v1685 = vpop.xlane.xlu0 %1684
    %1686 = vadd.xlane.f32.xlu0 %v1667
    %v1687 = vpop.xlane.xlu0 %1686
    %1688 = vadd.xlane.f32.xlu0 %v1668
    %v1689 = vpop.xlane.xlu0 %1688
    %1690 = vadd.xlane.f32.xlu0 %v1669
    %v1691 = vpop.xlane.xlu0 %1690
    %1692 = vadd.xlane.f32.xlu0 %v1670
    %v1693 = vpop.xlane.xlu0 %1692
    %1694 = vadd.xlane.f32.xlu0 %v1671
    %v1695 = vpop.xlane.xlu0 %1694
    %1696 = vadd.xlane.f32.xlu0 %v1672
    %v1697 = vpop.xlane.xlu0 %1696
    %1698 = vadd.xlane.f32.xlu0 %v1673
    %v1699 = vpop.xlane.xlu0 %1698
    %1700 = vadd.xlane.f32.xlu0 %v1674
    %v1701 = vpop.xlane.xlu0 %1700
    %1702 = vadd.xlane.f32.xlu0 %v1675
    %v1703 = vpop.xlane.xlu0 %1702
    %1704 = vadd.xlane.f32.xlu0 %v1676
    %v1705 = vpop.xlane.xlu0 %1704
    %1706 = vadd.xlane.f32.xlu0 %v1677
    %v1707 = vpop.xlane.xlu0 %1706
    %1708 = vadd.xlane.f32.xlu0 %v1678
    %v1709 = vpop.xlane.xlu0 %1708
    %1710 = vadd.xlane.f32.xlu0 %v1679
    %v1711 = vpop.xlane.xlu0 %1710
    %v1712 = vpack.c.bf16 %v1665, %v1664
    %v1713 = vpack.c.bf16 %v1667, %v1666
    %v1714 = vpack.c.bf16 %v1669, %v1668
    %v1715 = vpack.c.bf16 %v1671, %v1670
    %v1716 = vpack.c.bf16 %v1673, %v1672
    %v1717 = vpack.c.bf16 %v1675, %v1674
    %v1718 = vpack.c.bf16 %v1677, %v1676
    %v1719 = vpack.c.bf16 %v1679, %v1678
    %1720 = vmatprep.subr.bf16.mxu0 0
    %1721 = vmatpush1.bf16.msra.mxu0 %v1304
    %1722 = vmatprep.subr.bf16.mxu0 0
    %1723 = vmatpush1.bf16.msra.mxu0 %v1305
    %1724 = vmatprep.subr.bf16.mxu0 0
    %1725 = vmatpush1.bf16.msra.mxu0 %v1306
    %1726 = vmatprep.subr.bf16.mxu0 0
    %1727 = vmatpush1.bf16.msra.mxu0 %v1307
    %1728 = vmatprep.subr.bf16.mxu0 0
    %1729 = vmatpush1.bf16.msra.mxu0 %v1308
    %1730 = vmatprep.subr.bf16.mxu0 0
    %1731 = vmatpush1.bf16.msra.mxu0 %v1309
    %1732 = vmatprep.subr.bf16.mxu0 0
    %1733 = vmatpush1.bf16.msra.mxu0 %v1310
    %1734 = vmatprep.subr.bf16.mxu0 0
    %1735 = vmatpush1.bf16.msra.mxu0 %v1311
    %1736 = vmatprep.subr.bf16.mxu0 0
    %1737 = vmatpush1.bf16.msra.mxu0 0
    %1738 = vmatprep.subr.bf16.mxu0 0
    %1739 = vmatpush1.bf16.msra.mxu0 0
    %1740 = vmatprep.subr.bf16.mxu0 0
    %1741 = vmatpush1.bf16.msra.mxu0 0
    %1742 = vmatprep.subr.bf16.mxu0 0
    %1743 = vmatpush1.bf16.msra.mxu0 0
    %1744 = vmatprep.subr.bf16.mxu0 0
    %1745 = vmatpush1.bf16.msra.mxu0 0
    %1746 = vmatprep.subr.bf16.mxu0 0
    %1747 = vmatpush1.bf16.msra.mxu0 0
    %1748 = vmatprep.subr.bf16.mxu0 0
    %1749 = vmatpush1.bf16.msra.mxu0 0
    %1750 = vmatprep.subr.bf16.mxu0 0
    %1751 = vmatpush1.bf16.msra.mxu0 0
    %1752 = vmatprep.mubr.bf16.mxu0 0
    %1753 = vmatmul.mubr.bf16.gmra.mrb[0].mxu0 %v1712
    %v1754 = vpop.f32.mrb[0].mxu0
    %v1755 = vadd.f32 0.0, %v1754
    %v1756 = vpop.f32.mrb[0].mxu0
    %v1757 = vpop.f32.mrb[0].mxu0
    %v1758 = vadd.f32 0.0, %v1757
    %v1759 = vpop.f32.mrb[0].mxu0
    %1760 = vmatprep.mubr.bf16.mxu0 0
    %1761 = vmatmul.mubr.bf16.gmra.mrb[0].mxu0 %v1713
    %v1762 = vpop.f32.mrb[0].mxu0
    %v1763 = vadd.f32 0.0, %v1762
    %v1764 = vpop.f32.mrb[0].mxu0
    %v1765 = vpop.f32.mrb[0].mxu0
    %v1766 = vadd.f32 0.0, %v1765
    %v1767 = vpop.f32.mrb[0].mxu0
    %1768 = vmatprep.mubr.bf16.mxu0 0
    %1769 = vmatmul.mubr.bf16.gmra.mrb[0].mxu0 %v1714
    %v1770 = vpop.f32.mrb[0].mxu0
    %v1771 = vadd.f32 0.0, %v1770
    %v1772 = vpop.f32.mrb[0].mxu0
    %v1773 = vpop.f32.mrb[0].mxu0
    %v1774 = vadd.f32 0.0, %v1773
    %v1775 = vpop.f32.mrb[0].mxu0
    %1776 = vmatprep.mubr.bf16.mxu0 0
    %1777 = vmatmul.mubr.bf16.gmra.mrb[0].mxu0 %v1715
    %v1778 = vpop.f32.mrb[0].mxu0
    %v1779 = vadd.f32 0.0, %v1778
    %v1780 = vpop.f32.mrb[0].mxu0
    %v1781 = vpop.f32.mrb[0].mxu0
    %v1782 = vadd.f32 0.0, %v1781
    %v1783 = vpop.f32.mrb[0].mxu0
    %1784 = vmatprep.mubr.bf16.mxu0 0
    %1785 = vmatmul.mubr.bf16.gmra.mrb[0].mxu0 %v1716
    %v1786 = vpop.f32.mrb[0].mxu0
    %v1787 = vadd.f32 0.0, %v1786
    %v1788 = vpop.f32.mrb[0].mxu0
    %v1789 = vpop.f32.mrb[0].mxu0
    %v1790 = vadd.f32 0.0, %v1789
    %v1791 = vpop.f32.mrb[0].mxu0
    %1792 = vmatprep.mubr.bf16.mxu0 0
    %1793 = vmatmul.mubr.bf16.gmra.mrb[0].mxu0 %v1717
    %v1794 = vpop.f32.mrb[0].mxu0
    %v1795 = vadd.f32 0.0, %v1794
    %v1796 = vpop.f32.mrb[0].mxu0
    %v1797 = vpop.f32.mrb[0].mxu0
    %v1798 = vadd.f32 0.0, %v1797
    %v1799 = vpop.f32.mrb[0].mxu0
    %1800 = vmatprep.mubr.bf16.mxu0 0
    %1801 = vmatmul.mubr.bf16.gmra.mrb[0].mxu0 %v1718
    %v1802 = vpop.f32.mrb[0].mxu0
    %v1803 = vadd.f32 0.0, %v1802
    %v1804 = vpop.f32.mrb[0].mxu0
    %v1805 = vpop.f32.mrb[0].mxu0
    %v1806 = vadd.f32 0.0, %v1805
    %v1807 = vpop.f32.mrb[0].mxu0
    %1808 = vmatprep.mubr.bf16.mxu0 0
    %1809 = vmatmul.mubr.bf16.gmra.mrb[0].mxu0 %v1719
    %v1810 = vpop.f32.mrb[0].mxu0
    %v1811 = vadd.f32 0.0, %v1810
    %v1812 = vpop.f32.mrb[0].mxu0
    %v1813 = vpop.f32.mrb[0].mxu0
    %v1814 = vadd.f32 0.0, %v1813
    %v1815 = vpop.f32.mrb[0].mxu0
    %1816 = vdwg.mxu0
    %v1817 = vrcp.pop %v1681
    %v1818 = vrcp.pop %v1683
    %v1819 = vrcp.pop %v1685
    %v1820 = vrcp.pop %v1687
    %v1821 = vrcp.pop %v1689
    %v1822 = vrcp.pop %v1691
    %v1823 = vrcp.pop %v1693
    %v1824 = vrcp.pop %v1695
    %v1825 = vrcp.pop %v1697
    %v1826 = vrcp.pop %v1699
    %v1827 = vrcp.pop %v1701
    %v1828 = vrcp.pop %v1703
    %v1829 = vrcp.pop %v1705
    %v1830 = vrcp.pop %v1707
    %v1831 = vrcp.pop %v1709
    %v1832 = vrcp.pop %v1711
    %v1833 = vmul.f32 %v1755, %v1817
    %v1834 = vmul.f32 %v1758, %v1818
    %v1835 = vmul.f32 %v1763, %v1819
    %v1836 = vmul.f32 %v1766, %v1820
    %v1837 = vmul.f32 %v1771, %v1821
    %v1838 = vmul.f32 %v1774, %v1822
    %v1839 = vmul.f32 %v1779, %v1823
    %v1840 = vmul.f32 %v1782, %v1824
    %v1841 = vmul.f32 %v1787, %v1825
    %v1842 = vmul.f32 %v1790, %v1826
    %v1843 = vmul.f32 %v1795, %v1827
    %v1844 = vmul.f32 %v1798, %v1828
    %v1845 = vmul.f32 %v1803, %v1829
    %v1846 = vmul.f32 %v1806, %v1830
    %v1847 = vmul.f32 %v1811, %v1831
    %v1848 = vmul.f32 %v1814, %v1832
    %v1849 = vmax.f32 %v1833, 0.0
    %v1850 = vmax.f32 %v1834, 0.0
    %v1851 = vmax.f32 %v1835, 0.0
    %v1852 = vmax.f32 %v1836, 0.0
    %v1853 = vmax.f32 %v1837, 0.0
    %v1854 = vmax.f32 %v1838, 0.0
    %v1855 = vmax.f32 %v1839, 0.0
    %v1856 = vmax.f32 %v1840, 0.0
    %v1857 = vmax.f32 %v1841, 0.0
    %v1858 = vmax.f32 %v1842, 0.0
    %v1859 = vmax.f32 %v1843, 0.0
    %v1860 = vmax.f32 %v1844, 0.0
    %v1861 = vmax.f32 %v1845, 0.0
    %v1862 = vmax.f32 %v1846, 0.0
    %v1863 = vmax.f32 %v1847, 0.0
    %v1864 = vmax.f32 %v1848, 0.0
    %v1865 = vpack.c.bf16 %v1850, %v1849
    %v1866 = vpack.c.bf16 %v1852, %v1851
    %v1867 = vpack.c.bf16 %v1854, %v1853
    %v1868 = vpack.c.bf16 %v1856, %v1855
    %v1869 = vpack.c.bf16 %v1858, %v1857
    %v1870 = vpack.c.bf16 %v1860, %v1859
    %v1871 = vpack.c.bf16 %v1862, %v1861
    %v1872 = vpack.c.bf16 %v1864, %v1863
    %v1873 = vld [vmem:[%s6] sm:$0xf]
    %v1874 = vld [vmem:[%s6 + $0x4] sm:$0xf]
    %v1875 = vld [vmem:[%s6 + $0x8] sm:$0xf]
    %v1876 = vld [vmem:[%s6 + $0xc] sm:$0xf]
    %v1877 = vld [vmem:[%s6 + $0x10] sm:$0xf]
    %v1878 = vld [vmem:[%s6 + $0x14] sm:$0xf]
    %v1879 = vld [vmem:[%s6 + $0x18] sm:$0xf]
    %v1880 = vld [vmem:[%s6 + $0x1c] sm:$0xf]
    %v1881 = vld [vmem:[%s6 + $0x20] sm:$0xf]
    %v1882 = vld [vmem:[%s6 + $0x24] sm:$0xf]
    %v1883 = vld [vmem:[%s6 + $0x28] sm:$0xf]
    %v1884 = vld [vmem:[%s6 + $0x2c] sm:$0xf]
    %v1885 = vld [vmem:[%s6 + $0x30] sm:$0xf]
    %v1886 = vld [vmem:[%s6 + $0x34] sm:$0xf]
    %v1887 = vld [vmem:[%s6 + $0x38] sm:$0xf]
    %v1888 = vld [vmem:[%s6 + $0x3c] sm:$0xf]
    %v1889 = vld [vmem:[%s7] sm:$0x1]
    %v1891 = vlaneseq
    %v1892 = vshrl.u32 %v1891, 7
    %v1893 = vsub.s32 0, %v1892
    %v1894 = vrot.slane %v1889, %v1893
    %v1912 = vunpack.c.l.b16 %v1873
    %v1913 = vunpack.c.l.b16 %v1874
    %v1914 = vunpack.c.l.b16 %v1875
    %v1915 = vunpack.c.l.b16 %v1876
    %v1916 = vunpack.c.l.b16 %v1877
    %v1917 = vunpack.c.l.b16 %v1878
    %v1918 = vunpack.c.l.b16 %v1879
    %v1919 = vunpack.c.l.b16 %v1880
    %v1920 = vunpack.c.l.b16 %v1881
    %v1921 = vunpack.c.l.b16 %v1882
    %v1922 = vunpack.c.l.b16 %v1883
    %v1923 = vunpack.c.l.b16 %v1884
    %v1924 = vunpack.c.l.b16 %v1885
    %v1925 = vunpack.c.l.b16 %v1886
    %v1926 = vunpack.c.l.b16 %v1887
    %v1927 = vunpack.c.l.b16 %v1888
    %v1928 = vpack.c.b16 %v1913, %v1912
    %v1929 = vpack.c.b16 %v1915, %v1914
    %v1930 = vpack.c.b16 %v1917, %v1916
    %v1931 = vpack.c.b16 %v1919, %v1918
    %v1932 = vpack.c.b16 %v1921, %v1920
    %v1933 = vpack.c.b16 %v1923, %v1922
    %v1934 = vpack.c.b16 %v1925, %v1924
    %v1935 = vpack.c.b16 %v1927, %v1926
    %1944 = vmatprep.subr.bf16.mxu0 0
    %1945 = vmatpush1.bf16.msra.mxu0 %v1928
    %1946 = vmatprep.subr.bf16.mxu0 0
    %1947 = vmatpush1.bf16.msra.mxu0 %v1929
    %1948 = vmatprep.subr.bf16.mxu0 0
    %1949 = vmatpush1.bf16.msra.mxu0 %v1930
    %1950 = vmatprep.subr.bf16.mxu0 0
    %1951 = vmatpush1.bf16.msra.mxu0 %v1931
    %1952 = vmatprep.subr.bf16.mxu0 0
    %1953 = vmatpush1.bf16.msra.mxu0 %v1932
    %1954 = vmatprep.subr.bf16.mxu0 0
    %1955 = vmatpush1.bf16.msra.mxu0 %v1933
    %1956 = vmatprep.subr.bf16.mxu0 0
    %1957 = vmatpush1.bf16.msra.mxu0 %v1934
    %1958 = vmatprep.subr.bf16.mxu0 0
    %1959 = vmatpush1.bf16.msra.mxu0 %v1935
    %1960 = vmatprep.subr.bf16.mxu0 0
    %1961 = vmatpush1.bf16.msra.mxu0 0
    %1962 = vmatprep.subr.bf16.mxu0 0
    %1963 = vmatpush1.bf16.msra.mxu0 0
    %1964 = vmatprep.subr.bf16.mxu0 0
    %1965 = vmatpush1.bf16.msra.mxu0 0
    %1966 = vmatprep.subr.bf16.mxu0 0
    %1967 = vmatpush1.bf16.msra.mxu0 0
    %1968 = vmatprep.subr.bf16.mxu0 0
    %1969 = vmatpush1.bf16.msra.mxu0 0
    %1970 = vmatprep.subr.bf16.mxu0 0
    %1971 = vmatpush1.bf16.msra.mxu0 0
    %1972 = vmatprep.subr.bf16.mxu0 0
    %1973 = vmatpush1.bf16.msra.mxu0 0
    %1974 = vmatprep.subr.bf16.mxu0 0
    %1975 = vmatpush1.bf16.msra.mxu0 0
    %1976 = vmatprep.mubr.bf16.mxu0 0
    %1977 = vmatmul.mubr.bf16.gmra.mrb[0].mxu0 %v1865
    %v1978 = vpop.f32.mrb[0].mxu0
    %v1979 = vadd.f32 %v1894, %v1978
    %v1980 = vpop.f32.mrb[0].mxu0
    %v1981 = vpop.f32.mrb[0].mxu0
    %v1982 = vadd.f32 %v1894, %v1981
    %v1983 = vpop.f32.mrb[0].mxu0
    %1984 = vmatprep.mubr.bf16.mxu0 0
    %1985 = vmatmul.mubr.bf16.gmra.mrb[0].mxu0 %v1866
    %v1986 = vpop.f32.mrb[0].mxu0
    %v1987 = vadd.f32 %v1894, %v1986
    %v1988 = vpop.f32.mrb[0].mxu0
    %v1989 = vpop.f32.mrb[0].mxu0
    %v1990 = vadd.f32 %v1894, %v1989
    %v1991 = vpop.f32.mrb[0].mxu0
    %1992 = vmatprep.mubr.bf16.mxu0 0
    %1993 = vmatmul.mubr.bf16.gmra.mrb[0].mxu0 %v1867
    %v1994 = vpop.f32.mrb[0].mxu0
    %v1995 = vadd.f32 %v1894, %v1994
    %v1996 = vpop.f32.mrb[0].mxu0
    %v1997 = vpop.f32.mrb[0].mxu0
    %v1998 = vadd.f32 %v1894, %v1997
    %v1999 = vpop.f32.mrb[0].mxu0
    %2000 = vmatprep.mubr.bf16.mxu0 0
    %2001 = vmatmul.mubr.bf16.gmra.mrb[0].mxu0 %v1868
    %v2002 = vpop.f32.mrb[0].mxu0
    %v2003 = vadd.f32 %v1894, %v2002
    %v2004 = vpop.f32.mrb[0].mxu0
    %v2005 = vpop.f32.mrb[0].mxu0
    %v2006 = vadd.f32 %v1894, %v2005
    %v2007 = vpop.f32.mrb[0].mxu0
    %2008 = vmatprep.mubr.bf16.mxu0 0
    %2009 = vmatmul.mubr.bf16.gmra.mrb[0].mxu0 %v1869
    %v2010 = vpop.f32.mrb[0].mxu0
    %v2011 = vadd.f32 %v1894, %v2010
    %v2012 = vpop.f32.mrb[0].mxu0
    %v2013 = vpop.f32.mrb[0].mxu0
    %v2014 = vadd.f32 %v1894, %v2013
    %v2015 = vpop.f32.mrb[0].mxu0
    %2016 = vmatprep.mubr.bf16.mxu0 0
    %2017 = vmatmul.mubr.bf16.gmra.mrb[0].mxu0 %v1870
    %v2018 = vpop.f32.mrb[0].mxu0
    %v2019 = vadd.f32 %v1894, %v2018
    %v2020 = vpop.f32.mrb[0].mxu0
    %v2021 = vpop.f32.mrb[0].mxu0
    %v2022 = vadd.f32 %v1894, %v2021
    %v2023 = vpop.f32.mrb[0].mxu0
    %2024 = vmatprep.mubr.bf16.mxu0 0
    %2025 = vmatmul.mubr.bf16.gmra.mrb[0].mxu0 %v1871
    %v2026 = vpop.f32.mrb[0].mxu0
    %v2027 = vadd.f32 %v1894, %v2026
    %v2028 = vpop.f32.mrb[0].mxu0
    %v2029 = vpop.f32.mrb[0].mxu0
    %v2030 = vadd.f32 %v1894, %v2029
    %v2031 = vpop.f32.mrb[0].mxu0
    %2032 = vmatprep.mubr.bf16.mxu0 0
    %2033 = vmatmul.mubr.bf16.gmra.mrb[0].mxu0 %v1872
    %v2034 = vpop.f32.mrb[0].mxu0
    %v2035 = vadd.f32 %v1894, %v2034
    %v2036 = vpop.f32.mrb[0].mxu0
    %v2037 = vpop.f32.mrb[0].mxu0
    %v2038 = vadd.f32 %v1894, %v2037
    %v2039 = vpop.f32.mrb[0].mxu0
    %2040 = vdwg.mxu0
    %2041 = vmax.xlane.f32.xlu0 %v1979
    %v2042 = vpop.xlane.xlu0 %2041
    %2043 = vmax.xlane.f32.xlu0 %v1982
    %v2044 = vpop.xlane.xlu0 %2043
    %2045 = vmax.xlane.f32.xlu0 %v1987
    %v2046 = vpop.xlane.xlu0 %2045
    %2047 = vmax.xlane.f32.xlu0 %v1990
    %v2048 = vpop.xlane.xlu0 %2047
    %2049 = vmax.xlane.f32.xlu0 %v1995
    %v2050 = vpop.xlane.xlu0 %2049
    %2051 = vmax.xlane.f32.xlu0 %v1998
    %v2052 = vpop.xlane.xlu0 %2051
    %2053 = vmax.xlane.f32.xlu0 %v2003
    %v2054 = vpop.xlane.xlu0 %2053
    %2055 = vmax.xlane.f32.xlu0 %v2006
    %v2056 = vpop.xlane.xlu0 %2055
    %2057 = vmax.xlane.f32.xlu0 %v2011
    %v2058 = vpop.xlane.xlu0 %2057
    %2059 = vmax.xlane.f32.xlu0 %v2014
    %v2060 = vpop.xlane.xlu0 %2059
    %2061 = vmax.xlane.f32.xlu0 %v2019
    %v2062 = vpop.xlane.xlu0 %2061
    %2063 = vmax.xlane.f32.xlu0 %v2022
    %v2064 = vpop.xlane.xlu0 %2063
    %2065 = vmax.xlane.f32.xlu0 %v2027
    %v2066 = vpop.xlane.xlu0 %2065
    %2067 = vmax.xlane.f32.xlu0 %v2030
    %v2068 = vpop.xlane.xlu0 %2067
    %2069 = vmax.xlane.f32.xlu0 %v2035
    %v2070 = vpop.xlane.xlu0 %2069
    %2071 = vmax.xlane.f32.xlu0 %v2038
    %v2072 = vpop.xlane.xlu0 %2071
    %v2073 = vsub.f32 %v1979, %v2042
    %v2074 = vsub.f32 %v1982, %v2044
    %v2075 = vsub.f32 %v1987, %v2046
    %v2076 = vsub.f32 %v1990, %v2048
    %v2077 = vsub.f32 %v1995, %v2050
    %v2078 = vsub.f32 %v1998, %v2052
    %v2079 = vsub.f32 %v2003, %v2054
    %v2080 = vsub.f32 %v2006, %v2056
    %v2081 = vsub.f32 %v2011, %v2058
    %v2082 = vsub.f32 %v2014, %v2060
    %v2083 = vsub.f32 %v2019, %v2062
    %v2084 = vsub.f32 %v2022, %v2064
    %v2085 = vsub.f32 %v2027, %v2066
    %v2086 = vsub.f32 %v2030, %v2068
    %v2087 = vsub.f32 %v2035, %v2070
    %v2088 = vsub.f32 %v2038, %v2072
    %v2089 = vmul.f32 %v2073, 1.442695
    %v2090 = vpow.pop %v2089
    %v2091 = vmul.f32 %v2074, 1.442695
    %v2092 = vpow.pop %v2091
    %v2093 = vmul.f32 %v2075, 1.442695
    %v2094 = vpow.pop %v2093
    %v2095 = vmul.f32 %v2076, 1.442695
    %v2096 = vpow.pop %v2095
    %v2097 = vmul.f32 %v2077, 1.442695
    %v2098 = vpow.pop %v2097
    %v2099 = vmul.f32 %v2078, 1.442695
    %v2100 = vpow.pop %v2099
    %v2101 = vmul.f32 %v2079, 1.442695
    %v2102 = vpow.pop %v2101
    %v2103 = vmul.f32 %v2080, 1.442695
    %v2104 = vpow.pop %v2103
    %v2105 = vmul.f32 %v2081, 1.442695
    %v2106 = vpow.pop %v2105
    %v2107 = vmul.f32 %v2082, 1.442695
    %v2108 = vpow.pop %v2107
    %v2109 = vmul.f32 %v2083, 1.442695
    %v2110 = vpow.pop %v2109
    %v2111 = vmul.f32 %v2084, 1.442695
    %v2112 = vpow.pop %v2111
    %v2113 = vmul.f32 %v2085, 1.442695
    %v2114 = vpow.pop %v2113
    %v2115 = vmul.f32 %v2086, 1.442695
    %v2116 = vpow.pop %v2115
    %v2117 = vmul.f32 %v2087, 1.442695
    %v2118 = vpow.pop %v2117
    %v2119 = vmul.f32 %v2088, 1.442695
    %v2120 = vpow.pop %v2119
    %2121 = vadd.xlane.f32.xlu0 %v2090
    %v2122 = vpop.xlane.xlu0 %2121
    %2123 = vadd.xlane.f32.xlu0 %v2092
    %v2124 = vpop.xlane.xlu0 %2123
    %2125 = vadd.xlane.f32.xlu0 %v2094
    %v2126 = vpop.xlane.xlu0 %2125
    %2127 = vadd.xlane.f32.xlu0 %v2096
    %v2128 = vpop.xlane.xlu0 %2127
    %2129 = vadd.xlane.f32.xlu0 %v2098
    %v2130 = vpop.xlane.xlu0 %2129
    %2131 = vadd.xlane.f32.xlu0 %v2100
    %v2132 = vpop.xlane.xlu0 %2131
    %2133 = vadd.xlane.f32.xlu0 %v2102
    %v2134 = vpop.xlane.xlu0 %2133
    %2135 = vadd.xlane.f32.xlu0 %v2104
    %v2136 = vpop.xlane.xlu0 %2135
    %2137 = vadd.xlane.f32.xlu0 %v2106
    %v2138 = vpop.xlane.xlu0 %2137
    %2139 = vadd.xlane.f32.xlu0 %v2108
    %v2140 = vpop.xlane.xlu0 %2139
    %2141 = vadd.xlane.f32.xlu0 %v2110
    %v2142 = vpop.xlane.xlu0 %2141
    %2143 = vadd.xlane.f32.xlu0 %v2112
    %v2144 = vpop.xlane.xlu0 %2143
    %2145 = vadd.xlane.f32.xlu0 %v2114
    %v2146 = vpop.xlane.xlu0 %2145
    %2147 = vadd.xlane.f32.xlu0 %v2116
    %v2148 = vpop.xlane.xlu0 %2147
    %2149 = vadd.xlane.f32.xlu0 %v2118
    %v2150 = vpop.xlane.xlu0 %2149
    %2151 = vadd.xlane.f32.xlu0 %v2120
    %v2152 = vpop.xlane.xlu0 %2151
    %v2153 = vlog2.pop %v2122
    %v2154 = vmul.f32 %v2153, 0.6931472
    %v2155 = vlog2.pop %v2124
    %v2156 = vmul.f32 %v2155, 0.6931472
    %v2157 = vlog2.pop %v2126
    %v2158 = vmul.f32 %v2157, 0.6931472
    %v2159 = vlog2.pop %v2128
    %v2160 = vmul.f32 %v2159, 0.6931472
    %v2161 = vlog2.pop %v2130
    %v2162 = vmul.f32 %v2161, 0.6931472
    %v2163 = vlog2.pop %v2132
    %v2164 = vmul.f32 %v2163, 0.6931472
    %v2165 = vlog2.pop %v2134
    %v2166 = vmul.f32 %v2165, 0.6931472
    %v2167 = vlog2.pop %v2136
    %v2168 = vmul.f32 %v2167, 0.6931472
    %v2169 = vlog2.pop %v2138
    %v2170 = vmul.f32 %v2169, 0.6931472
    %v2171 = vlog2.pop %v2140
    %v2172 = vmul.f32 %v2171, 0.6931472
    %v2173 = vlog2.pop %v2142
    %v2174 = vmul.f32 %v2173, 0.6931472
    %v2175 = vlog2.pop %v2144
    %v2176 = vmul.f32 %v2175, 0.6931472
    %v2177 = vlog2.pop %v2146
    %v2178 = vmul.f32 %v2177, 0.6931472
    %v2179 = vlog2.pop %v2148
    %v2180 = vmul.f32 %v2179, 0.6931472
    %v2181 = vlog2.pop %v2150
    %v2182 = vmul.f32 %v2181, 0.6931472
    %v2183 = vlog2.pop %v2152
    %v2184 = vmul.f32 %v2183, 0.6931472
    %v2185 = vsub.f32 %v2073, %v2154
    %v2186 = vsub.f32 %v2074, %v2156
    %v2187 = vsub.f32 %v2075, %v2158
    %v2188 = vsub.f32 %v2076, %v2160
    %v2189 = vsub.f32 %v2077, %v2162
    %v2190 = vsub.f32 %v2078, %v2164
    %v2191 = vsub.f32 %v2079, %v2166
    %v2192 = vsub.f32 %v2080, %v2168
    %v2193 = vsub.f32 %v2081, %v2170
    %v2194 = vsub.f32 %v2082, %v2172
    %v2195 = vsub.f32 %v2083, %v2174
    %v2196 = vsub.f32 %v2084, %v2176
    %v2197 = vsub.f32 %v2085, %v2178
    %v2198 = vsub.f32 %v2086, %v2180
    %v2199 = vsub.f32 %v2087, %v2182
    %v2200 = vsub.f32 %v2088, %v2184
    %2201 = vst [vmem:[%s8] sm:$0xff] %v2185
    %2202 = vst [vmem:[%s8 + $0x8] sm:$0xff] %v2186
    %2203 = vst [vmem:[%s8 + $0x10] sm:$0xff] %v2187
    %2204 = vst [vmem:[%s8 + $0x18] sm:$0xff] %v2188
    %2205 = vst [vmem:[%s8 + $0x20] sm:$0xff] %v2189
    %2206 = vst [vmem:[%s8 + $0x28] sm:$0xff] %v2190
    %2207 = vst [vmem:[%s8 + $0x30] sm:$0xff] %v2191
    %2208 = vst [vmem:[%s8 + $0x38] sm:$0xff] %v2192
    %2209 = vst [vmem:[%s8 + $0x40] sm:$0xff] %v2193
    %2210 = vst [vmem:[%s8 + $0x48] sm:$0xff] %v2194
    %2211 = vst [vmem:[%s8 + $0x50] sm:$0xff] %v2195
    %2212 = vst [vmem:[%s8 + $0x58] sm:$0xff] %v2196
    %2213 = vst [vmem:[%s8 + $0x60] sm:$0xff] %v2197
    %2214 = vst [vmem:[%s8 + $0x68] sm:$0xff] %v2198
    %2215 = vst [vmem:[%s8 + $0x70] sm:$0xff] %v2199
    %2216 = vst [vmem:[%s8 + $0x78] sm:$0xff] %v2200
    // Predicated region
    $region38: #{net_forward.1} parent=1 // pred_check
      _
    $region39: #{net_forward.1} parent=1 // pred_check_branch
      %2218 = sbr.rel (0) target = $region41
    $region40: #{net_forward.1} parent=1 // pred_region
      _
    $region41: #{net_forward.1} parent=1 // pred_fallthru
      _
    // Predicated region
    $region42: #{net_forward.1} parent=1 // pred_check
      _
    $region43: #{net_forward.1} parent=1 // pred_check_branch
      %2220 = sbr.rel (0) target = $region45
    $region44: #{net_forward.1} parent=1 // pred_region
      _
    $region45: #{net_forward.1} parent=1 // pred_fallthru
      _
    %2221 = vsyncpa [#allocation3], 1

</llo_original>
